<compile_context>
chip_gen: v7x
topology: tpu7x:2x2x1
jax: 0.10.0
libtpu: 0.0.40
codegen_flags: <defaults>
</compile_context>

<pallas_src>
import jax
import jax.numpy as jnp
from jax.experimental import pallas as pl
from jax.experimental.pallas import tpu as pltpu

# ----- small, FastSpeech-consistent config -----
B, S, D = 2, 8, 32              # batch, seq, d_model
N_HEAD, D_K, D_V = 2, 16, 16    # heads, per-head dims
D_INNER = 64                    # FFN hidden (d_inner)
K1, PAD1 = 9, 4                 # fft_conv1d_kernel[0], fft_conv1d_padding[0]
K2, PAD2 = 1, 0                 # fft_conv1d_kernel[1], fft_conv1d_padding[1]
EPS = 1e-5                      # nn.LayerNorm default eps
BS = B * S


def _layer_norm(x, g, b):
    mu = jnp.mean(x, axis=-1, keepdims=True)
    var = jnp.mean((x - mu) ** 2, axis=-1, keepdims=True)
    return (x - mu) * jax.lax.rsqrt(var + EPS) * g + b


def fft_block_kernel(
    # inputs
    x_ref, npm_ref, sam_ref,
    ln0_g, ln0_b,
    wq3, bq3, wk3, bk3, wv3, bv3, wfc3, bfc,
    lnm_g, lnm_b, lnp_g, lnp_b,
    w1f, b1, w2, b2,
    # outputs
    out_ref, attn_ref,
):
    x2d = x_ref[...].reshape(BS, D)           # (B*S, D)
    npm2d = npm_ref[...].reshape(BS, 1)       # (B*S, 1)   non_pad_mask
    sam = sam_ref[...]                        # (B, S, S)  slf_attn_mask (1 = masked)

    # 1) FFTBlock pre layer-norm (f32)
    xn2d = _layer_norm(x2d, ln0_g[...], ln0_b[...])
    xn_bf = xn2d.astype(jnp.bfloat16)

    # additive attention bias instead of masked_fill(-inf): no NaN hazard
    bias = sam * jnp.float32(-1e30)           # (B, S, S)
    inv_temp = 1.0 / (float(D_K) ** 0.5)

    # 2) Multi-head self-attention (heads via leading-axis weight slices)
    mha2d = jnp.zeros((BS, D), jnp.float32)
    attn_list = []
    for h in range(N_HEAD):
        qh = jnp.dot(xn_bf, wq3[h], preferred_element_type=jnp.float32) + bq3[h]
        kh = jnp.dot(xn_bf, wk3[h], preferred_element_type=jnp.float32) + bk3[h]
        vh = jnp.dot(xn_bf, wv3[h], preferred_element_type=jnp.float32) + bv3[h]
        qh3 = qh.reshape(B, S, D_K).astype(jnp.bfloat16)
        kh3 = kh.reshape(B, S, D_K).astype(jnp.bfloat16)
        vh3 = vh.reshape(B, S, D_V).astype(jnp.bfloat16)

        scores = jnp.einsum("bqd,bkd->bqk", qh3, kh3,
                            preferred_element_type=jnp.float32) * inv_temp
        scores = scores + bias
        m = jnp.max(scores, axis=-1, keepdims=True)
        e = jnp.exp(scores - m)
        denom = jnp.sum(e, axis=-1, keepdims=True)
        p = e * pl.reciprocal(denom, approx=True)       # softmax(dim=-1)
        attn_list.append(p)

        oh = jnp.einsum("bqk,bkd->bqd", p.astype(jnp.bfloat16), vh3,
                        preferred_element_type=jnp.float32)    # (B, S, D_V)
        oh2d = oh.reshape(BS, D_V).astype(jnp.bfloat16)
        # output projection absorbed per head (avoids a lane-dim concat)
        mha2d = mha2d + jnp.dot(oh2d, wfc3[h],
                                preferred_element_type=jnp.float32)

    # one coalesced store for all heads / batches
    attn_ref[...] = jnp.stack(attn_list, axis=0)        # (N_HEAD, B, S, S)

    # TODO(synk): Dropout layers are identities (eval mode) — no RNG in kernel.
    mha2d = mha2d + bfc[...]
    mha2d = _layer_norm(mha2d + xn2d, lnm_g[...], lnm_b[...])   # MHA residual + LN

    # 3) post-attention layer_norm_pff + non-pad mask
    y2d = _layer_norm(mha2d, lnp_g[...], lnp_b[...]) * npm2d

    # 4) Position-wise FFN: Conv1d(k=9,p=4) -> ReLU -> Conv1d(k=1) -> +residual
    #    im2col slab via circular rolls (XLU) + edge masks; one MXU matmul.
    row = jax.lax.broadcasted_iota(jnp.int32, (BS, 1), 0) % S   # index within seq
    cols = []
    for t in range(K1):
        off = t - PAD1                     # conv tap reads y[i + off]
        if off == 0:
            cols.append(y2d)
            continue
        rolled = pltpu.roll(y2d, shift=(-off) % BS, axis=0)     # rolled[j] = y[j+off]
        valid = jnp.logical_and(row + off >= 0, row + off < S)  # zero padding / batch edge
        cols.append(jnp.where(valid, rolled, 0.0))
    slab = jnp.concatenate(cols, axis=-1).astype(jnp.bfloat16)  # (B*S, K1*D)

    h1 = jnp.dot(slab, w1f[...], preferred_element_type=jnp.float32) + b1[...]
    h1 = jnp.maximum(h1, 0.0).astype(jnp.bfloat16)
    h2 = jnp.dot(h1, w2[...], preferred_element_type=jnp.float32) + b2[...]
    out2d = (h2 + y2d) * npm2d

    out_ref[...] = out2d.reshape(B, S, D).astype(out_ref.dtype)


def fft_block(x, non_pad_mask, slf_attn_mask, params):
    bf16 = jnp.bfloat16

    # head-major weight re-layouts (+ bf16 pre-cast for the MXU inputs)
    wq3 = params["wq"].reshape(D, N_HEAD, D_K).transpose(1, 0, 2).astype(bf16)
    wk3 = params["wk"].reshape(D, N_HEAD, D_K).transpose(1, 0, 2).astype(bf16)
    wv3 = params["wv"].reshape(D, N_HEAD, D_V).transpose(1, 0, 2).astype(bf16)
    bq3 = params["bq"].reshape(N_HEAD, 1, D_K)
    bk3 = params["bk"].reshape(N_HEAD, 1, D_K)
    bv3 = params["bv"].reshape(N_HEAD, 1, D_V)
    wfc3 = params["wfc"].reshape(N_HEAD, D_V, D).astype(bf16)
    w1f = params["w1"].reshape(K1 * D, D_INNER).astype(bf16)   # im2col weight slab
    w2b = params["w2"].astype(bf16)

    weight_list = [
        params["ln0_g"], params["ln0_b"],
        wq3, bq3, wk3, bk3, wv3, bv3, wfc3, params["bfc"],
        params["lnm_g"], params["lnm_b"], params["lnp_g"], params["lnp_b"],
        w1f, params["b1"], w2b, params["b2"],
    ]

    def full_spec(a):
        nd = a.ndim
        return pl.BlockSpec(a.shape, lambda i, _nd=nd: (0,) * _nd)

    in_specs = [
        pl.BlockSpec((B, S, D), lambda i: (0, 0, 0)),   # x (whole batch, one block)
        pl.BlockSpec((B, S, 1), lambda i: (0, 0, 0)),   # non_pad_mask
        pl.BlockSpec((B, S, S), lambda i: (0, 0, 0)),   # slf_attn_mask
    ] + [full_spec(w) for w in weight_list]

    out_specs = [
        pl.BlockSpec((B, S, D), lambda i: (0, 0, 0)),            # enc_output
        pl.BlockSpec((N_HEAD, B, S, S), lambda i: (0, 0, 0, 0)), # attention weights
    ]

    out_shape = (
        jax.ShapeDtypeStruct((B, S, D), jnp.float32),
        jax.ShapeDtypeStruct((N_HEAD, B, S, S), jnp.float32),
    )

    out, attn = pl.pallas_call(
        fft_block_kernel,
        out_shape=out_shape,
        grid_spec=pltpu.PrefetchScalarGridSpec(
            num_scalar_prefetch=0,
            grid=(1,),                       # single fused block: no per-batch grid
            in_specs=in_specs,
            out_specs=out_specs,
        ),
        compiler_params=pltpu.CompilerParams(
            dimension_semantics=("arbitrary",)),
    )(x, non_pad_mask, slf_attn_mask, *weight_list)

    # match PyTorch attn layout (n_head * batch, len_q, len_k), head-major
    return out, attn.reshape(N_HEAD * B, S, S)


# ---------- pure-JAX f32 reference (same semantics) for a sanity check ----------
def fft_block_ref(x, npm, sam, p):
    def ln(v, g, b):
        mu = v.mean(-1, keepdims=True)
        var = ((v - mu) ** 2).mean(-1, keepdims=True)
        return (v - mu) / jnp.sqrt(var + EPS) * g + b

    xn = ln(x, p["ln0_g"], p["ln0_b"])
    q = xn @ p["wq"] + p["bq"]
    k = xn @ p["wk"] + p["bk"]
    v = xn @ p["wv"] + p["bv"]
    qh = q.reshape(B, S, N_HEAD, D_K).transpose(0, 2, 1, 3)
    kh = k.reshape(B, S, N_HEAD, D_K).transpose(0, 2, 1, 3)
    vh = v.reshape(B, S, N_HEAD, D_V).transpose(0, 2, 1, 3)
    scores = jnp.einsum("bhqd,bhkd->bhqk", qh, kh) / (float(D_K) ** 0.5)
    scores = jnp.where(sam[:, None, :, :] > 0, -jnp.inf, scores)
    attn = jax.nn.softmax(scores, axis=-1)
    oh = jnp.einsum("bhqk,bhkd->bhqd", attn, vh)
    o = oh.transpose(0, 2, 1, 3).reshape(B, S, N_HEAD * D_V)
    o = o @ p["wfc"] + p["bfc"]
    o = ln(o + xn, p["lnm_g"], p["lnm_b"])
    y = ln(o, p["lnp_g"], p["lnp_b"]) * npm
    ypad = jnp.pad(y, ((0, 0), (PAD1, PAD1), (0, 0)))
    h1 = jnp.zeros((B, S, D_INNER), jnp.float32)
    for t in range(K1):
        h1 = h1 + ypad[:, t:t + S, :] @ p["w1"][t]
    h1 = jax.nn.relu(h1 + p["b1"])
    h2 = h1 @ p["w2"] + p["b2"]
    out = (h2 + y) * npm
    return out, attn.transpose(1, 0, 2, 3).reshape(N_HEAD * B, S, S)


def make_params(key):
    ks = jax.random.split(key, 12)
    def rnd(k, shape, scale=0.1):
        return (scale * jax.random.normal(k, shape)).astype(jnp.float32)
    p = {
        # LayerNorms (gamma=1, beta=0)
        "ln0_g": jnp.ones((1, D), jnp.float32), "ln0_b": jnp.zeros((1, D), jnp.float32),
        "lnm_g": jnp.ones((1, D), jnp.float32), "lnm_b": jnp.zeros((1, D), jnp.float32),
        "lnp_g": jnp.ones((1, D), jnp.float32), "lnp_b": jnp.zeros((1, D), jnp.float32),
        # attention projections
        "wq": rnd(ks[0], (D, N_HEAD * D_K)), "bq": rnd(ks[1], (1, N_HEAD * D_K), 0.01),
        "wk": rnd(ks[2], (D, N_HEAD * D_K)), "bk": rnd(ks[3], (1, N_HEAD * D_K), 0.01),
        "wv": rnd(ks[4], (D, N_HEAD * D_V)), "bv": rnd(ks[5], (1, N_HEAD * D_V), 0.01),
        "wfc": rnd(ks[6], (N_HEAD * D_V, D)), "bfc": rnd(ks[7], (1, D), 0.01),
        # Conv1d weights rearranged: w1: (K1, C_in=D, C_out=D_INNER), w2: (D_INNER, D)
        "w1": rnd(ks[8], (K1, D, D_INNER)), "b1": rnd(ks[9], (1, D_INNER), 0.01),
        "w2": rnd(ks[10], (D_INNER, D)), "b2": rnd(ks[11], (1, D), 0.01),
    }
    return p


if __name__ == "__main__":
    key = jax.random.PRNGKey(0)
    kx, kp = jax.random.split(key)
    x = jax.random.normal(kx, (B, S, D), dtype=jnp.float32)
    params = make_params(kp)

    # sequence lengths [8, 6] -> padding masks
    lengths = jnp.array([8, 6])
    pos = jnp.arange(S)
    non_pad_mask = (pos[None, :] < lengths[:, None]).astype(jnp.float32)[..., None]   # (B,S,1)
    slf_attn_mask = (pos[None, None, :] >= lengths[:, None, None]).astype(jnp.float32)
    slf_attn_mask = jnp.broadcast_to(slf_attn_mask, (B, S, S)).astype(jnp.float32)     # (B,S,S)

    out, attn = fft_block(x, non_pad_mask, slf_attn_mask, params)
    out = jax.block_until_ready(out)
    attn = jax.block_until_ready(attn)

    ref_out, ref_attn = fft_block_ref(x, non_pad_mask, slf_attn_mask, params)
    assert out.shape == (B, S, D) and attn.shape == (N_HEAD * B, S, S)
    # bf16 MXU inputs + approx softmax reciprocal (per perf review) cost ~2-3
    # decimal digits vs. the pure-f32 reference, hence the slightly looser
    # tolerances compared to an all-f32 kernel.
    assert jnp.allclose(out, ref_out, atol=5e-2, rtol=5e-2), \
        float(jnp.max(jnp.abs(out - ref_out)))
    assert jnp.allclose(attn, ref_attn, atol=2e-2, rtol=2e-2), \
        float(jnp.max(jnp.abs(attn - ref_attn)))

    print("KERNEL_OK")
</pallas_src>

<mosaic_0001>
module attributes {stable_mosaic.version = 11 : i64} {
  func.func @fft_block_kernel(%arg0: i32, %arg1: memref<2x8x32xf32, #tpu.memory_space<vmem>>, %arg2: memref<2x8x1xf32, #tpu.memory_space<vmem>>, %arg3: memref<2x8x8xf32, #tpu.memory_space<vmem>>, %arg4: memref<1x32xf32, #tpu.memory_space<vmem>>, %arg5: memref<1x32xf32, #tpu.memory_space<vmem>>, %arg6: memref<2x32x16xbf16, #tpu.memory_space<vmem>>, %arg7: memref<2x1x16xf32, #tpu.memory_space<vmem>>, %arg8: memref<2x32x16xbf16, #tpu.memory_space<vmem>>, %arg9: memref<2x1x16xf32, #tpu.memory_space<vmem>>, %arg10: memref<2x32x16xbf16, #tpu.memory_space<vmem>>, %arg11: memref<2x1x16xf32, #tpu.memory_space<vmem>>, %arg12: memref<2x16x32xbf16, #tpu.memory_space<vmem>>, %arg13: memref<1x32xf32, #tpu.memory_space<vmem>>, %arg14: memref<1x32xf32, #tpu.memory_space<vmem>>, %arg15: memref<1x32xf32, #tpu.memory_space<vmem>>, %arg16: memref<1x32xf32, #tpu.memory_space<vmem>>, %arg17: memref<1x32xf32, #tpu.memory_space<vmem>>, %arg18: memref<288x64xbf16, #tpu.memory_space<vmem>>, %arg19: memref<1x64xf32, #tpu.memory_space<vmem>>, %arg20: memref<64x32xbf16, #tpu.memory_space<vmem>>, %arg21: memref<1x32xf32, #tpu.memory_space<vmem>>, %arg22: memref<2x8x32xf32, #tpu.memory_space<vmem>>, %arg23: memref<2x2x8x8xf32, #tpu.memory_space<vmem>>) attributes {dimension_semantics = [#tpu.dimension_semantics<arbitrary>], iteration_bounds = array<i64: 1>, scalar_prefetch = 0 : i64, scratch_operands = 0 : i64, tpu.core_type = #tpu.core_type<tc>, window_params = [{pipeline_mode = #tpu.pipeline_mode<synchronous>, transform_indices = @transform_0, window_bounds = array<i64: 2, 8, 32>}, {pipeline_mode = #tpu.pipeline_mode<synchronous>, transform_indices = @transform_1, window_bounds = array<i64: 2, 8, 1>}, {pipeline_mode = #tpu.pipeline_mode<synchronous>, transform_indices = @transform_2, window_bounds = array<i64: 2, 8, 8>}, {pipeline_mode = #tpu.pipeline_mode<synchronous>, transform_indices = @transform_3, window_bounds = array<i64: 1, 32>}, {pipeline_mode = #tpu.pipeline_mode<synchronous>, transform_indices = @transform_4, window_bounds = array<i64: 1, 32>}, {pipeline_mode = #tpu.pipeline_mode<synchronous>, transform_indices = @transform_5, window_bounds = array<i64: 2, 32, 16>}, {pipeline_mode = #tpu.pipeline_mode<synchronous>, transform_indices = @transform_6, window_bounds = array<i64: 2, 1, 16>}, {pipeline_mode = #tpu.pipeline_mode<synchronous>, transform_indices = @transform_7, window_bounds = array<i64: 2, 32, 16>}, {pipeline_mode = #tpu.pipeline_mode<synchronous>, transform_indices = @transform_8, window_bounds = array<i64: 2, 1, 16>}, {pipeline_mode = #tpu.pipeline_mode<synchronous>, transform_indices = @transform_9, window_bounds = array<i64: 2, 32, 16>}, {pipeline_mode = #tpu.pipeline_mode<synchronous>, transform_indices = @transform_10, window_bounds = array<i64: 2, 1, 16>}, {pipeline_mode = #tpu.pipeline_mode<synchronous>, transform_indices = @transform_11, window_bounds = array<i64: 2, 16, 32>}, {pipeline_mode = #tpu.pipeline_mode<synchronous>, transform_indices = @transform_12, window_bounds = array<i64: 1, 32>}, {pipeline_mode = #tpu.pipeline_mode<synchronous>, transform_indices = @transform_13, window_bounds = array<i64: 1, 32>}, {pipeline_mode = #tpu.pipeline_mode<synchronous>, transform_indices = @transform_14, window_bounds = array<i64: 1, 32>}, {pipeline_mode = #tpu.pipeline_mode<synchronous>, transform_indices = @transform_15, window_bounds = array<i64: 1, 32>}, {pipeline_mode = #tpu.pipeline_mode<synchronous>, transform_indices = @transform_16, window_bounds = array<i64: 1, 32>}, {pipeline_mode = #tpu.pipeline_mode<synchronous>, transform_indices = @transform_17, window_bounds = array<i64: 288, 64>}, {pipeline_mode = #tpu.pipeline_mode<synchronous>, transform_indices = @transform_18, window_bounds = array<i64: 1, 64>}, {pipeline_mode = #tpu.pipeline_mode<synchronous>, transform_indices = @transform_19, window_bounds = array<i64: 64, 32>}, {pipeline_mode = #tpu.pipeline_mode<synchronous>, transform_indices = @transform_20, window_bounds = array<i64: 1, 32>}, {pipeline_mode = #tpu.pipeline_mode<synchronous>, transform_indices = @transform_21, window_bounds = array<i64: 2, 8, 32>}, {pipeline_mode = #tpu.pipeline_mode<synchronous>, transform_indices = @transform_22, window_bounds = array<i64: 2, 2, 8, 8>}]} {
    %c0 = arith.constant 0 : index
    %c0_0 = arith.constant 0 : index
    %c0_1 = arith.constant 0 : index
    %0 = vector.load %arg1[%c0, %c0_0, %c0_1] : memref<2x8x32xf32, #tpu.memory_space<vmem>>, vector<2x8x32xf32>
    %1 = vector.shape_cast %0 : vector<2x8x32xf32> to vector<16x32xf32>
    %c0_2 = arith.constant 0 : index
    %c0_3 = arith.constant 0 : index
    %c0_4 = arith.constant 0 : index
    %2 = vector.load %arg2[%c0_2, %c0_3, %c0_4] : memref<2x8x1xf32, #tpu.memory_space<vmem>>, vector<2x8x1xf32>
    %3 = vector.shape_cast %2 : vector<2x8x1xf32> to vector<16x1xf32>
    %c0_5 = arith.constant 0 : index
    %c0_6 = arith.constant 0 : index
    %c0_7 = arith.constant 0 : index
    %4 = vector.load %arg3[%c0_5, %c0_6, %c0_7] : memref<2x8x8xf32, #tpu.memory_space<vmem>>, vector<2x8x8xf32>
    %c0_8 = arith.constant 0 : index
    %c0_9 = arith.constant 0 : index
    %5 = vector.load %arg4[%c0_8, %c0_9] : memref<1x32xf32, #tpu.memory_space<vmem>>, vector<1x32xf32>
    %c0_10 = arith.constant 0 : index
    %c0_11 = arith.constant 0 : index
    %6 = vector.load %arg5[%c0_10, %c0_11] : memref<1x32xf32, #tpu.memory_space<vmem>>, vector<1x32xf32>
    %cst = arith.constant dense<0.000000e+00> : vector<16xf32>
    %7 = vector.multi_reduction <add>, %1, %cst [1] : vector<16x32xf32> to vector<16xf32>
    %8 = vector.shape_cast %7 : vector<16xf32> to vector<16x1xf32>
    %cst_12 = arith.constant 3.200000e+01 : f32
    %9 = vector.broadcast %cst_12 : f32 to vector<16x1xf32>
    %10 = arith.divf %8, %9 : vector<16x1xf32>
    %11 = vector.broadcast %10 : vector<16x1xf32> to vector<16x32xf32>
    %12 = arith.subf %1, %11 : vector<16x32xf32>
    %13 = arith.mulf %12, %12 : vector<16x32xf32>
    %cst_13 = arith.constant dense<0.000000e+00> : vector<16xf32>
    %14 = vector.multi_reduction <add>, %13, %cst_13 [1] : vector<16x32xf32> to vector<16xf32>
    %15 = vector.shape_cast %14 : vector<16xf32> to vector<16x1xf32>
    %cst_14 = arith.constant 3.200000e+01 : f32
    %16 = vector.broadcast %cst_14 : f32 to vector<16x1xf32>
    %17 = arith.divf %15, %16 : vector<16x1xf32>
    %18 = vector.broadcast %10 : vector<16x1xf32> to vector<16x32xf32>
    %19 = arith.subf %1, %18 : vector<16x32xf32>
    %cst_15 = arith.constant 9.99999974E-6 : f32
    %20 = vector.broadcast %cst_15 : f32 to vector<16x1xf32>
    %21 = arith.addf %17, %20 : vector<16x1xf32>
    %22 = math.rsqrt %21 : vector<16x1xf32>
    %23 = vector.broadcast %22 : vector<16x1xf32> to vector<16x32xf32>
    %24 = arith.mulf %19, %23 : vector<16x32xf32>
    %25 = vector.broadcast %5 : vector<1x32xf32> to vector<16x32xf32>
    %26 = arith.mulf %24, %25 : vector<16x32xf32>
    %27 = vector.broadcast %6 : vector<1x32xf32> to vector<16x32xf32>
    %28 = arith.addf %26, %27 : vector<16x32xf32>
    %29 = arith.truncf %28 : vector<16x32xf32> to vector<16x32xbf16>
    %cst_16 = arith.constant -1.000000e+30 : f32
    %30 = vector.broadcast %cst_16 : f32 to vector<2x8x8xf32>
    %31 = arith.mulf %4, %30 : vector<2x8x8xf32>
    %cst_17 = arith.constant 0.000000e+00 : f32
    %32 = vector.broadcast %cst_17 : f32 to vector<16x32xf32>
    %c0_18 = arith.constant 0 : index
    %c0_19 = arith.constant 0 : index
    %c0_20 = arith.constant 0 : index
    %33 = vector.load %arg6[%c0_18, %c0_19, %c0_20] : memref<2x32x16xbf16, #tpu.memory_space<vmem>>, vector<1x32x16xbf16>
    %34 = vector.shape_cast %33 : vector<1x32x16xbf16> to vector<32x16xbf16>
    %cst_21 = arith.constant dense<0.000000e+00> : vector<16x16xf32>
    %35 = tpu.matmul %29, %34, %cst_21 {dimension_numbers = #tpu.dot_dimension_numbers<[1], [0], [0], [1], [0, 0, 1, 1], [], []>} : vector<16x32xbf16>, vector<32x16xbf16>, vector<16x16xf32> -> vector<16x16xf32>
    %c0_22 = arith.constant 0 : index
    %c0_23 = arith.constant 0 : index
    %c0_24 = arith.constant 0 : index
    %36 = vector.load %arg7[%c0_22, %c0_23, %c0_24] : memref<2x1x16xf32, #tpu.memory_space<vmem>>, vector<1x1x16xf32>
    %37 = vector.shape_cast %36 : vector<1x1x16xf32> to vector<1x16xf32>
    %38 = vector.broadcast %37 : vector<1x16xf32> to vector<16x16xf32>
    %39 = arith.addf %35, %38 : vector<16x16xf32>
    %c0_25 = arith.constant 0 : index
    %c0_26 = arith.constant 0 : index
    %c0_27 = arith.constant 0 : index
    %40 = vector.load %arg8[%c0_25, %c0_26, %c0_27] : memref<2x32x16xbf16, #tpu.memory_space<vmem>>, vector<1x32x16xbf16>
    %41 = vector.shape_cast %40 : vector<1x32x16xbf16> to vector<32x16xbf16>
    %cst_28 = arith.constant dense<0.000000e+00> : vector<16x16xf32>
    %42 = tpu.matmul %29, %41, %cst_28 {dimension_numbers = #tpu.dot_dimension_numbers<[1], [0], [0], [1], [0, 0, 1, 1], [], []>} : vector<16x32xbf16>, vector<32x16xbf16>, vector<16x16xf32> -> vector<16x16xf32>
    %c0_29 = arith.constant 0 : index
    %c0_30 = arith.constant 0 : index
    %c0_31 = arith.constant 0 : index
    %43 = vector.load %arg9[%c0_29, %c0_30, %c0_31] : memref<2x1x16xf32, #tpu.memory_space<vmem>>, vector<1x1x16xf32>
    %44 = vector.shape_cast %43 : vector<1x1x16xf32> to vector<1x16xf32>
    %45 = vector.broadcast %44 : vector<1x16xf32> to vector<16x16xf32>
    %46 = arith.addf %42, %45 : vector<16x16xf32>
    %c0_32 = arith.constant 0 : index
    %c0_33 = arith.constant 0 : index
    %c0_34 = arith.constant 0 : index
    %47 = vector.load %arg10[%c0_32, %c0_33, %c0_34] : memref<2x32x16xbf16, #tpu.memory_space<vmem>>, vector<1x32x16xbf16>
    %48 = vector.shape_cast %47 : vector<1x32x16xbf16> to vector<32x16xbf16>
    %cst_35 = arith.constant dense<0.000000e+00> : vector<16x16xf32>
    %49 = tpu.matmul %29, %48, %cst_35 {dimension_numbers = #tpu.dot_dimension_numbers<[1], [0], [0], [1], [0, 0, 1, 1], [], []>} : vector<16x32xbf16>, vector<32x16xbf16>, vector<16x16xf32> -> vector<16x16xf32>
    %c0_36 = arith.constant 0 : index
    %c0_37 = arith.constant 0 : index
    %c0_38 = arith.constant 0 : index
    %50 = vector.load %arg11[%c0_36, %c0_37, %c0_38] : memref<2x1x16xf32, #tpu.memory_space<vmem>>, vector<1x1x16xf32>
    %51 = vector.shape_cast %50 : vector<1x1x16xf32> to vector<1x16xf32>
    %52 = vector.broadcast %51 : vector<1x16xf32> to vector<16x16xf32>
    %53 = arith.addf %49, %52 : vector<16x16xf32>
    %54 = vector.shape_cast %39 : vector<16x16xf32> to vector<2x8x16xf32>
    %55 = arith.truncf %54 : vector<2x8x16xf32> to vector<2x8x16xbf16>
    %56 = vector.shape_cast %46 : vector<16x16xf32> to vector<2x8x16xf32>
    %57 = arith.truncf %56 : vector<2x8x16xf32> to vector<2x8x16xbf16>
    %58 = vector.shape_cast %53 : vector<16x16xf32> to vector<2x8x16xf32>
    %59 = arith.truncf %58 : vector<2x8x16xf32> to vector<2x8x16xbf16>
    "tpu.trace_start"() <{level = 10 : i32, message = "bqd,bkd->bqk"}> : () -> ()
    %cst_39 = arith.constant dense<0.000000e+00> : vector<2x8x8xf32>
    %60 = tpu.matmul %55, %57, %cst_39 {dimension_numbers = #tpu.dot_dimension_numbers<[2], [2], [1], [1], [0, 0, 0, 1, 1, 1], [0], [0]>} : vector<2x8x16xbf16>, vector<2x8x16xbf16>, vector<2x8x8xf32> -> vector<2x8x8xf32>
    "tpu.trace_stop"() : () -> ()
    %cst_40 = arith.constant 2.500000e-01 : f32
    %61 = vector.broadcast %cst_40 : f32 to vector<2x8x8xf32>
    %62 = arith.mulf %60, %61 : vector<2x8x8xf32>
    %63 = arith.addf %62, %31 : vector<2x8x8xf32>
    %cst_41 = arith.constant dense<0xFF800000> : vector<2x8xf32>
    %64 = vector.multi_reduction <maximumf>, %63, %cst_41 [2] : vector<2x8x8xf32> to vector<2x8xf32>
    %65 = vector.shape_cast %64 : vector<2x8xf32> to vector<2x8x1xf32>
    %66 = vector.broadcast %65 : vector<2x8x1xf32> to vector<2x8x8xf32>
    %67 = arith.subf %63, %66 : vector<2x8x8xf32>
    %68 = math.exp %67 : vector<2x8x8xf32>
    %cst_42 = arith.constant dense<0.000000e+00> : vector<2x8xf32>
    %69 = vector.multi_reduction <add>, %68, %cst_42 [2] : vector<2x8x8xf32> to vector<2x8xf32>
    %70 = vector.shape_cast %69 : vector<2x8xf32> to vector<2x8x1xf32>
    %71 = tpu.reciprocal %70 {approx = true} : vector<2x8x1xf32> -> vector<2x8x1xf32>
    %72 = vector.broadcast %71 : vector<2x8x1xf32> to vector<2x8x8xf32>
    %73 = arith.mulf %68, %72 : vector<2x8x8xf32>
    %74 = arith.truncf %73 : vector<2x8x8xf32> to vector<2x8x8xbf16>
    "tpu.trace_start"() <{level = 10 : i32, message = "bqk,bkd->bqd"}> : () -> ()
    %cst_43 = arith.constant dense<0.000000e+00> : vector<2x8x16xf32>
    %75 = tpu.matmul %74, %59, %cst_43 {dimension_numbers = #tpu.dot_dimension_numbers<[2], [1], [1], [2], [0, 0, 0, 1, 1, 2], [0], [0]>} : vector<2x8x8xbf16>, vector<2x8x16xbf16>, vector<2x8x16xf32> -> vector<2x8x16xf32>
    "tpu.trace_stop"() : () -> ()
    %76 = vector.shape_cast %75 : vector<2x8x16xf32> to vector<16x16xf32>
    %77 = arith.truncf %76 : vector<16x16xf32> to vector<16x16xbf16>
    %c0_44 = arith.constant 0 : index
    %c0_45 = arith.constant 0 : index
    %c0_46 = arith.constant 0 : index
    %78 = vector.load %arg12[%c0_44, %c0_45, %c0_46] : memref<2x16x32xbf16, #tpu.memory_space<vmem>>, vector<1x16x32xbf16>
    %79 = vector.shape_cast %78 : vector<1x16x32xbf16> to vector<16x32xbf16>
    %cst_47 = arith.constant dense<0.000000e+00> : vector<16x32xf32>
    %80 = tpu.matmul %77, %79, %cst_47 {dimension_numbers = #tpu.dot_dimension_numbers<[1], [0], [0], [1], [0, 0, 1, 1], [], []>} : vector<16x16xbf16>, vector<16x32xbf16>, vector<16x32xf32> -> vector<16x32xf32>
    %81 = arith.addf %32, %80 : vector<16x32xf32>
    %c1 = arith.constant 1 : index
    %c0_48 = arith.constant 0 : index
    %c0_49 = arith.constant 0 : index
    %82 = vector.load %arg6[%c1, %c0_48, %c0_49] : memref<2x32x16xbf16, #tpu.memory_space<vmem>>, vector<1x32x16xbf16>
    %83 = vector.shape_cast %82 : vector<1x32x16xbf16> to vector<32x16xbf16>
    %cst_50 = arith.constant dense<0.000000e+00> : vector<16x16xf32>
    %84 = tpu.matmul %29, %83, %cst_50 {dimension_numbers = #tpu.dot_dimension_numbers<[1], [0], [0], [1], [0, 0, 1, 1], [], []>} : vector<16x32xbf16>, vector<32x16xbf16>, vector<16x16xf32> -> vector<16x16xf32>
    %c1_51 = arith.constant 1 : index
    %c0_52 = arith.constant 0 : index
    %c0_53 = arith.constant 0 : index
    %85 = vector.load %arg7[%c1_51, %c0_52, %c0_53] : memref<2x1x16xf32, #tpu.memory_space<vmem>>, vector<1x1x16xf32>
    %86 = vector.shape_cast %85 : vector<1x1x16xf32> to vector<1x16xf32>
    %87 = vector.broadcast %86 : vector<1x16xf32> to vector<16x16xf32>
    %88 = arith.addf %84, %87 : vector<16x16xf32>
    %c1_54 = arith.constant 1 : index
    %c0_55 = arith.constant 0 : index
    %c0_56 = arith.constant 0 : index
    %89 = vector.load %arg8[%c1_54, %c0_55, %c0_56] : memref<2x32x16xbf16, #tpu.memory_space<vmem>>, vector<1x32x16xbf16>
    %90 = vector.shape_cast %89 : vector<1x32x16xbf16> to vector<32x16xbf16>
    %cst_57 = arith.constant dense<0.000000e+00> : vector<16x16xf32>
    %91 = tpu.matmul %29, %90, %cst_57 {dimension_numbers = #tpu.dot_dimension_numbers<[1], [0], [0], [1], [0, 0, 1, 1], [], []>} : vector<16x32xbf16>, vector<32x16xbf16>, vector<16x16xf32> -> vector<16x16xf32>
    %c1_58 = arith.constant 1 : index
    %c0_59 = arith.constant 0 : index
    %c0_60 = arith.constant 0 : index
    %92 = vector.load %arg9[%c1_58, %c0_59, %c0_60] : memref<2x1x16xf32, #tpu.memory_space<vmem>>, vector<1x1x16xf32>
    %93 = vector.shape_cast %92 : vector<1x1x16xf32> to vector<1x16xf32>
    %94 = vector.broadcast %93 : vector<1x16xf32> to vector<16x16xf32>
    %95 = arith.addf %91, %94 : vector<16x16xf32>
    %c1_61 = arith.constant 1 : index
    %c0_62 = arith.constant 0 : index
    %c0_63 = arith.constant 0 : index
    %96 = vector.load %arg10[%c1_61, %c0_62, %c0_63] : memref<2x32x16xbf16, #tpu.memory_space<vmem>>, vector<1x32x16xbf16>
    %97 = vector.shape_cast %96 : vector<1x32x16xbf16> to vector<32x16xbf16>
    %cst_64 = arith.constant dense<0.000000e+00> : vector<16x16xf32>
    %98 = tpu.matmul %29, %97, %cst_64 {dimension_numbers = #tpu.dot_dimension_numbers<[1], [0], [0], [1], [0, 0, 1, 1], [], []>} : vector<16x32xbf16>, vector<32x16xbf16>, vector<16x16xf32> -> vector<16x16xf32>
    %c1_65 = arith.constant 1 : index
    %c0_66 = arith.constant 0 : index
    %c0_67 = arith.constant 0 : index
    %99 = vector.load %arg11[%c1_65, %c0_66, %c0_67] : memref<2x1x16xf32, #tpu.memory_space<vmem>>, vector<1x1x16xf32>
    %100 = vector.shape_cast %99 : vector<1x1x16xf32> to vector<1x16xf32>
    %101 = vector.broadcast %100 : vector<1x16xf32> to vector<16x16xf32>
    %102 = arith.addf %98, %101 : vector<16x16xf32>
    %103 = vector.shape_cast %88 : vector<16x16xf32> to vector<2x8x16xf32>
    %104 = arith.truncf %103 : vector<2x8x16xf32> to vector<2x8x16xbf16>
    %105 = vector.shape_cast %95 : vector<16x16xf32> to vector<2x8x16xf32>
    %106 = arith.truncf %105 : vector<2x8x16xf32> to vector<2x8x16xbf16>
    %107 = vector.shape_cast %102 : vector<16x16xf32> to vector<2x8x16xf32>
    %108 = arith.truncf %107 : vector<2x8x16xf32> to vector<2x8x16xbf16>
    "tpu.trace_start"() <{level = 10 : i32, message = "bqd,bkd->bqk"}> : () -> ()
    %cst_68 = arith.constant dense<0.000000e+00> : vector<2x8x8xf32>
    %109 = tpu.matmul %104, %106, %cst_68 {dimension_numbers = #tpu.dot_dimension_numbers<[2], [2], [1], [1], [0, 0, 0, 1, 1, 1], [0], [0]>} : vector<2x8x16xbf16>, vector<2x8x16xbf16>, vector<2x8x8xf32> -> vector<2x8x8xf32>
    "tpu.trace_stop"() : () -> ()
    %cst_69 = arith.constant 2.500000e-01 : f32
    %110 = vector.broadcast %cst_69 : f32 to vector<2x8x8xf32>
    %111 = arith.mulf %109, %110 : vector<2x8x8xf32>
    %112 = arith.addf %111, %31 : vector<2x8x8xf32>
    %cst_70 = arith.constant dense<0xFF800000> : vector<2x8xf32>
    %113 = vector.multi_reduction <maximumf>, %112, %cst_70 [2] : vector<2x8x8xf32> to vector<2x8xf32>
    %114 = vector.shape_cast %113 : vector<2x8xf32> to vector<2x8x1xf32>
    %115 = vector.broadcast %114 : vector<2x8x1xf32> to vector<2x8x8xf32>
    %116 = arith.subf %112, %115 : vector<2x8x8xf32>
    %117 = math.exp %116 : vector<2x8x8xf32>
    %cst_71 = arith.constant dense<0.000000e+00> : vector<2x8xf32>
    %118 = vector.multi_reduction <add>, %117, %cst_71 [2] : vector<2x8x8xf32> to vector<2x8xf32>
    %119 = vector.shape_cast %118 : vector<2x8xf32> to vector<2x8x1xf32>
    %120 = tpu.reciprocal %119 {approx = true} : vector<2x8x1xf32> -> vector<2x8x1xf32>
    %121 = vector.broadcast %120 : vector<2x8x1xf32> to vector<2x8x8xf32>
    %122 = arith.mulf %117, %121 : vector<2x8x8xf32>
    %123 = arith.truncf %122 : vector<2x8x8xf32> to vector<2x8x8xbf16>
    "tpu.trace_start"() <{level = 10 : i32, message = "bqk,bkd->bqd"}> : () -> ()
    %cst_72 = arith.constant dense<0.000000e+00> : vector<2x8x16xf32>
    %124 = tpu.matmul %123, %108, %cst_72 {dimension_numbers = #tpu.dot_dimension_numbers<[2], [1], [1], [2], [0, 0, 0, 1, 1, 2], [0], [0]>} : vector<2x8x8xbf16>, vector<2x8x16xbf16>, vector<2x8x16xf32> -> vector<2x8x16xf32>
    "tpu.trace_stop"() : () -> ()
    %125 = vector.shape_cast %124 : vector<2x8x16xf32> to vector<16x16xf32>
    %126 = arith.truncf %125 : vector<16x16xf32> to vector<16x16xbf16>
    %c1_73 = arith.constant 1 : index
    %c0_74 = arith.constant 0 : index
    %c0_75 = arith.constant 0 : index
    %127 = vector.load %arg12[%c1_73, %c0_74, %c0_75] : memref<2x16x32xbf16, #tpu.memory_space<vmem>>, vector<1x16x32xbf16>
    %128 = vector.shape_cast %127 : vector<1x16x32xbf16> to vector<16x32xbf16>
    %cst_76 = arith.constant dense<0.000000e+00> : vector<16x32xf32>
    %129 = tpu.matmul %126, %128, %cst_76 {dimension_numbers = #tpu.dot_dimension_numbers<[1], [0], [0], [1], [0, 0, 1, 1], [], []>} : vector<16x16xbf16>, vector<16x32xbf16>, vector<16x32xf32> -> vector<16x32xf32>
    %130 = arith.addf %81, %129 : vector<16x32xf32>
    %131 = vector.shape_cast %73 : vector<2x8x8xf32> to vector<1x2x8x8xf32>
    %132 = vector.shape_cast %122 : vector<2x8x8xf32> to vector<1x2x8x8xf32>
    %133 = tpu.concatenate %131, %132 in 0 : vector<1x2x8x8xf32>, vector<1x2x8x8xf32> -> vector<2x2x8x8xf32>
    %c0_77 = arith.constant 0 : index
    %c0_78 = arith.constant 0 : index
    %c0_79 = arith.constant 0 : index
    %c0_80 = arith.constant 0 : index
    %134 = vector.load %arg23[%c0_77, %c0_78, %c0_79, %c0_80] : memref<2x2x8x8xf32, #tpu.memory_space<vmem>>, vector<2x2x8x8xf32>
    tpu.vector_store %arg23[%c0_77, %c0_78, %c0_79, %c0_80], %133 {strides = array<i32>} : memref<2x2x8x8xf32, #tpu.memory_space<vmem>>, vector<2x2x8x8xf32>,
    %c0_81 = arith.constant 0 : index
    %c0_82 = arith.constant 0 : index
    %135 = vector.load %arg13[%c0_81, %c0_82] : memref<1x32xf32, #tpu.memory_space<vmem>>, vector<1x32xf32>
    %136 = vector.broadcast %135 : vector<1x32xf32> to vector<16x32xf32>
    %137 = arith.addf %130, %136 : vector<16x32xf32>
    %138 = arith.addf %137, %28 : vector<16x32xf32>
    %c0_83 = arith.constant 0 : index
    %c0_84 = arith.constant 0 : index
    %139 = vector.load %arg14[%c0_83, %c0_84] : memref<1x32xf32, #tpu.memory_space<vmem>>, vector<1x32xf32>
    %c0_85 = arith.constant 0 : index
    %c0_86 = arith.constant 0 : index
    %140 = vector.load %arg15[%c0_85, %c0_86] : memref<1x32xf32, #tpu.memory_space<vmem>>, vector<1x32xf32>
    %cst_87 = arith.constant dense<0.000000e+00> : vector<16xf32>
    %141 = vector.multi_reduction <add>, %138, %cst_87 [1] : vector<16x32xf32> to vector<16xf32>
    %142 = vector.shape_cast %141 : vector<16xf32> to vector<16x1xf32>
    %cst_88 = arith.constant 3.200000e+01 : f32
    %143 = vector.broadcast %cst_88 : f32 to vector<16x1xf32>
    %144 = arith.divf %142, %143 : vector<16x1xf32>
    %145 = vector.broadcast %144 : vector<16x1xf32> to vector<16x32xf32>
    %146 = arith.subf %138, %145 : vector<16x32xf32>
    %147 = arith.mulf %146, %146 : vector<16x32xf32>
    %cst_89 = arith.constant dense<0.000000e+00> : vector<16xf32>
    %148 = vector.multi_reduction <add>, %147, %cst_89 [1] : vector<16x32xf32> to vector<16xf32>
    %149 = vector.shape_cast %148 : vector<16xf32> to vector<16x1xf32>
    %cst_90 = arith.constant 3.200000e+01 : f32
    %150 = vector.broadcast %cst_90 : f32 to vector<16x1xf32>
    %151 = arith.divf %149, %150 : vector<16x1xf32>
    %152 = vector.broadcast %144 : vector<16x1xf32> to vector<16x32xf32>
    %153 = arith.subf %138, %152 : vector<16x32xf32>
    %cst_91 = arith.constant 9.99999974E-6 : f32
    %154 = vector.broadcast %cst_91 : f32 to vector<16x1xf32>
    %155 = arith.addf %151, %154 : vector<16x1xf32>
    %156 = math.rsqrt %155 : vector<16x1xf32>
    %157 = vector.broadcast %156 : vector<16x1xf32> to vector<16x32xf32>
    %158 = arith.mulf %153, %157 : vector<16x32xf32>
    %159 = vector.broadcast %139 : vector<1x32xf32> to vector<16x32xf32>
    %160 = arith.mulf %158, %159 : vector<16x32xf32>
    %161 = vector.broadcast %140 : vector<1x32xf32> to vector<16x32xf32>
    %162 = arith.addf %160, %161 : vector<16x32xf32>
    %c0_92 = arith.constant 0 : index
    %c0_93 = arith.constant 0 : index
    %163 = vector.load %arg16[%c0_92, %c0_93] : memref<1x32xf32, #tpu.memory_space<vmem>>, vector<1x32xf32>
    %c0_94 = arith.constant 0 : index
    %c0_95 = arith.constant 0 : index
    %164 = vector.load %arg17[%c0_94, %c0_95] : memref<1x32xf32, #tpu.memory_space<vmem>>, vector<1x32xf32>
    %cst_96 = arith.constant dense<0.000000e+00> : vector<16xf32>
    %165 = vector.multi_reduction <add>, %162, %cst_96 [1] : vector<16x32xf32> to vector<16xf32>
    %166 = vector.shape_cast %165 : vector<16xf32> to vector<16x1xf32>
    %cst_97 = arith.constant 3.200000e+01 : f32
    %167 = vector.broadcast %cst_97 : f32 to vector<16x1xf32>
    %168 = arith.divf %166, %167 : vector<16x1xf32>
    %169 = vector.broadcast %168 : vector<16x1xf32> to vector<16x32xf32>
    %170 = arith.subf %162, %169 : vector<16x32xf32>
    %171 = arith.mulf %170, %170 : vector<16x32xf32>
    %cst_98 = arith.constant dense<0.000000e+00> : vector<16xf32>
    %172 = vector.multi_reduction <add>, %171, %cst_98 [1] : vector<16x32xf32> to vector<16xf32>
    %173 = vector.shape_cast %172 : vector<16xf32> to vector<16x1xf32>
    %cst_99 = arith.constant 3.200000e+01 : f32
    %174 = vector.broadcast %cst_99 : f32 to vector<16x1xf32>
    %175 = arith.divf %173, %174 : vector<16x1xf32>
    %176 = vector.broadcast %168 : vector<16x1xf32> to vector<16x32xf32>
    %177 = arith.subf %162, %176 : vector<16x32xf32>
    %cst_100 = arith.constant 9.99999974E-6 : f32
    %178 = vector.broadcast %cst_100 : f32 to vector<16x1xf32>
    %179 = arith.addf %175, %178 : vector<16x1xf32>
    %180 = math.rsqrt %179 : vector<16x1xf32>
    %181 = vector.broadcast %180 : vector<16x1xf32> to vector<16x32xf32>
    %182 = arith.mulf %177, %181 : vector<16x32xf32>
    %183 = vector.broadcast %163 : vector<1x32xf32> to vector<16x32xf32>
    %184 = arith.mulf %182, %183 : vector<16x32xf32>
    %185 = vector.broadcast %164 : vector<1x32xf32> to vector<16x32xf32>
    %186 = arith.addf %184, %185 : vector<16x32xf32>
    %187 = vector.broadcast %3 : vector<16x1xf32> to vector<16x32xf32>
    %188 = arith.mulf %186, %187 : vector<16x32xf32>
    %189 = tpu.iota {dimensions = array<i32: 0>} : vector<16x1xi32>
    %c8_i32 = arith.constant 8 : i32
    %c0_i32 = arith.constant 0 : i32
    %190 = arith.cmpi eq, %c8_i32, %c0_i32 : i32
    %c1_i32 = arith.constant 1 : i32
    %191 = arith.select %190, %c1_i32, %c8_i32 : i32
    %192 = vector.broadcast %191 : i32 to vector<16x1xi32>
    %193 = arith.remsi %189, %192 : vector<16x1xi32>
    %c0_i32_101 = arith.constant 0 : i32
    %194 = vector.broadcast %c0_i32_101 : i32 to vector<16x1xi32>
    %195 = arith.cmpi ne, %193, %194 : vector<16x1xi32>
    %c0_i32_102 = arith.constant 0 : i32
    %196 = vector.broadcast %c0_i32_102 : i32 to vector<16x1xi32>
    %197 = arith.cmpi slt, %193, %196 : vector<16x1xi32>
    %c0_i32_103 = arith.constant 0 : i32
    %198 = arith.cmpi slt, %191, %c0_i32_103 : i32
    %199 = vector.broadcast %198 : i1 to vector<16x1xi1>
    %200 = vector.broadcast %199 : vector<16x1xi1> to vector<16x1xi1>
    %201 = arith.xori %197, %200 : vector<16x1xi1>
    %202 = arith.andi %201, %195 : vector<16x1xi1>
    %203 = vector.broadcast %191 : i32 to vector<16x1xi32>
    %204 = arith.addi %193, %203 : vector<16x1xi32>
    %205 = arith.select %202, %204, %193 : vector<16x1xi1>, vector<16x1xi32>
    %c4_i32 = arith.constant 4 : i32
    %206 = tpu.dynamic_rotate %188 by %c4_i32 dim 0 : vector<16x32xf32>, i32 -> vector<16x32xf32>
    %c-4_i32 = arith.constant -4 : i32
    %207 = vector.broadcast %c-4_i32 : i32 to vector<16x1xi32>
    %208 = arith.addi %205, %207 : vector<16x1xi32>
    %c0_i32_104 = arith.constant 0 : i32
    %209 = vector.broadcast %c0_i32_104 : i32 to vector<16x1xi32>
    %210 = arith.cmpi sge, %208, %209 : vector<16x1xi32>
    %c-4_i32_105 = arith.constant -4 : i32
    %211 = vector.broadcast %c-4_i32_105 : i32 to vector<16x1xi32>
    %212 = arith.addi %205, %211 : vector<16x1xi32>
    %c8_i32_106 = arith.constant 8 : i32
    %213 = vector.broadcast %c8_i32_106 : i32 to vector<16x1xi32>
    %214 = arith.cmpi slt, %212, %213 : vector<16x1xi32>
    %215 = arith.andi %210, %214 : vector<16x1xi1>
    %cst_107 = arith.constant 0.000000e+00 : f32
    %216 = vector.shape_cast %215 : vector<16x1xi1> to vector<16x1xi1>
    %217 = vector.broadcast %216 : vector<16x1xi1> to vector<16x32xi1>
    %218 = vector.broadcast %cst_107 : f32 to vector<16x32xf32>
    %219 = arith.select %217, %206, %218 : vector<16x32xi1>, vector<16x32xf32>
    %c3_i32 = arith.constant 3 : i32
    %220 = tpu.dynamic_rotate %188 by %c3_i32 dim 0 : vector<16x32xf32>, i32 -> vector<16x32xf32>
    %c-3_i32 = arith.constant -3 : i32
    %221 = vector.broadcast %c-3_i32 : i32 to vector<16x1xi32>
    %222 = arith.addi %205, %221 : vector<16x1xi32>
    %c0_i32_108 = arith.constant 0 : i32
    %223 = vector.broadcast %c0_i32_108 : i32 to vector<16x1xi32>
    %224 = arith.cmpi sge, %222, %223 : vector<16x1xi32>
    %c-3_i32_109 = arith.constant -3 : i32
    %225 = vector.broadcast %c-3_i32_109 : i32 to vector<16x1xi32>
    %226 = arith.addi %205, %225 : vector<16x1xi32>
    %c8_i32_110 = arith.constant 8 : i32
    %227 = vector.broadcast %c8_i32_110 : i32 to vector<16x1xi32>
    %228 = arith.cmpi slt, %226, %227 : vector<16x1xi32>
    %229 = arith.andi %224, %228 : vector<16x1xi1>
    %cst_111 = arith.constant 0.000000e+00 : f32
    %230 = vector.shape_cast %229 : vector<16x1xi1> to vector<16x1xi1>
    %231 = vector.broadcast %230 : vector<16x1xi1> to vector<16x32xi1>
    %232 = vector.broadcast %cst_111 : f32 to vector<16x32xf32>
    %233 = arith.select %231, %220, %232 : vector<16x32xi1>, vector<16x32xf32>
    %c2_i32 = arith.constant 2 : i32
    %234 = tpu.dynamic_rotate %188 by %c2_i32 dim 0 : vector<16x32xf32>, i32 -> vector<16x32xf32>
    %c-2_i32 = arith.constant -2 : i32
    %235 = vector.broadcast %c-2_i32 : i32 to vector<16x1xi32>
    %236 = arith.addi %205, %235 : vector<16x1xi32>
    %c0_i32_112 = arith.constant 0 : i32
    %237 = vector.broadcast %c0_i32_112 : i32 to vector<16x1xi32>
    %238 = arith.cmpi sge, %236, %237 : vector<16x1xi32>
    %c-2_i32_113 = arith.constant -2 : i32
    %239 = vector.broadcast %c-2_i32_113 : i32 to vector<16x1xi32>
    %240 = arith.addi %205, %239 : vector<16x1xi32>
    %c8_i32_114 = arith.constant 8 : i32
    %241 = vector.broadcast %c8_i32_114 : i32 to vector<16x1xi32>
    %242 = arith.cmpi slt, %240, %241 : vector<16x1xi32>
    %243 = arith.andi %238, %242 : vector<16x1xi1>
    %cst_115 = arith.constant 0.000000e+00 : f32
    %244 = vector.shape_cast %243 : vector<16x1xi1> to vector<16x1xi1>
    %245 = vector.broadcast %244 : vector<16x1xi1> to vector<16x32xi1>
    %246 = vector.broadcast %cst_115 : f32 to vector<16x32xf32>
    %247 = arith.select %245, %234, %246 : vector<16x32xi1>, vector<16x32xf32>
    %c1_i32_116 = arith.constant 1 : i32
    %248 = tpu.dynamic_rotate %188 by %c1_i32_116 dim 0 : vector<16x32xf32>, i32 -> vector<16x32xf32>
    %c-1_i32 = arith.constant -1 : i32
    %249 = vector.broadcast %c-1_i32 : i32 to vector<16x1xi32>
    %250 = arith.addi %205, %249 : vector<16x1xi32>
    %c0_i32_117 = arith.constant 0 : i32
    %251 = vector.broadcast %c0_i32_117 : i32 to vector<16x1xi32>
    %252 = arith.cmpi sge, %250, %251 : vector<16x1xi32>
    %c-1_i32_118 = arith.constant -1 : i32
    %253 = vector.broadcast %c-1_i32_118 : i32 to vector<16x1xi32>
    %254 = arith.addi %205, %253 : vector<16x1xi32>
    %c8_i32_119 = arith.constant 8 : i32
    %255 = vector.broadcast %c8_i32_119 : i32 to vector<16x1xi32>
    %256 = arith.cmpi slt, %254, %255 : vector<16x1xi32>
    %257 = arith.andi %252, %256 : vector<16x1xi1>
    %cst_120 = arith.constant 0.000000e+00 : f32
    %258 = vector.shape_cast %257 : vector<16x1xi1> to vector<16x1xi1>
    %259 = vector.broadcast %258 : vector<16x1xi1> to vector<16x32xi1>
    %260 = vector.broadcast %cst_120 : f32 to vector<16x32xf32>
    %261 = arith.select %259, %248, %260 : vector<16x32xi1>, vector<16x32xf32>
    %c15_i32 = arith.constant 15 : i32
    %262 = tpu.dynamic_rotate %188 by %c15_i32 dim 0 : vector<16x32xf32>, i32 -> vector<16x32xf32>
    %c1_i32_121 = arith.constant 1 : i32
    %263 = vector.broadcast %c1_i32_121 : i32 to vector<16x1xi32>
    %264 = arith.addi %205, %263 : vector<16x1xi32>
    %c0_i32_122 = arith.constant 0 : i32
    %265 = vector.broadcast %c0_i32_122 : i32 to vector<16x1xi32>
    %266 = arith.cmpi sge, %264, %265 : vector<16x1xi32>
    %c1_i32_123 = arith.constant 1 : i32
    %267 = vector.broadcast %c1_i32_123 : i32 to vector<16x1xi32>
    %268 = arith.addi %205, %267 : vector<16x1xi32>
    %c8_i32_124 = arith.constant 8 : i32
    %269 = vector.broadcast %c8_i32_124 : i32 to vector<16x1xi32>
    %270 = arith.cmpi slt, %268, %269 : vector<16x1xi32>
    %271 = arith.andi %266, %270 : vector<16x1xi1>
    %cst_125 = arith.constant 0.000000e+00 : f32
    %272 = vector.shape_cast %271 : vector<16x1xi1> to vector<16x1xi1>
    %273 = vector.broadcast %272 : vector<16x1xi1> to vector<16x32xi1>
    %274 = vector.broadcast %cst_125 : f32 to vector<16x32xf32>
    %275 = arith.select %273, %262, %274 : vector<16x32xi1>, vector<16x32xf32>
    %c14_i32 = arith.constant 14 : i32
    %276 = tpu.dynamic_rotate %188 by %c14_i32 dim 0 : vector<16x32xf32>, i32 -> vector<16x32xf32>
    %c2_i32_126 = arith.constant 2 : i32
    %277 = vector.broadcast %c2_i32_126 : i32 to vector<16x1xi32>
    %278 = arith.addi %205, %277 : vector<16x1xi32>
    %c0_i32_127 = arith.constant 0 : i32
    %279 = vector.broadcast %c0_i32_127 : i32 to vector<16x1xi32>
    %280 = arith.cmpi sge, %278, %279 : vector<16x1xi32>
    %c2_i32_128 = arith.constant 2 : i32
    %281 = vector.broadcast %c2_i32_128 : i32 to vector<16x1xi32>
    %282 = arith.addi %205, %281 : vector<16x1xi32>
    %c8_i32_129 = arith.constant 8 : i32
    %283 = vector.broadcast %c8_i32_129 : i32 to vector<16x1xi32>
    %284 = arith.cmpi slt, %282, %283 : vector<16x1xi32>
    %285 = arith.andi %280, %284 : vector<16x1xi1>
    %cst_130 = arith.constant 0.000000e+00 : f32
    %286 = vector.shape_cast %285 : vector<16x1xi1> to vector<16x1xi1>
    %287 = vector.broadcast %286 : vector<16x1xi1> to vector<16x32xi1>
    %288 = vector.broadcast %cst_130 : f32 to vector<16x32xf32>
    %289 = arith.select %287, %276, %288 : vector<16x32xi1>, vector<16x32xf32>
    %c13_i32 = arith.constant 13 : i32
    %290 = tpu.dynamic_rotate %188 by %c13_i32 dim 0 : vector<16x32xf32>, i32 -> vector<16x32xf32>
    %c3_i32_131 = arith.constant 3 : i32
    %291 = vector.broadcast %c3_i32_131 : i32 to vector<16x1xi32>
    %292 = arith.addi %205, %291 : vector<16x1xi32>
    %c0_i32_132 = arith.constant 0 : i32
    %293 = vector.broadcast %c0_i32_132 : i32 to vector<16x1xi32>
    %294 = arith.cmpi sge, %292, %293 : vector<16x1xi32>
    %c3_i32_133 = arith.constant 3 : i32
    %295 = vector.broadcast %c3_i32_133 : i32 to vector<16x1xi32>
    %296 = arith.addi %205, %295 : vector<16x1xi32>
    %c8_i32_134 = arith.constant 8 : i32
    %297 = vector.broadcast %c8_i32_134 : i32 to vector<16x1xi32>
    %298 = arith.cmpi slt, %296, %297 : vector<16x1xi32>
    %299 = arith.andi %294, %298 : vector<16x1xi1>
    %cst_135 = arith.constant 0.000000e+00 : f32
    %300 = vector.shape_cast %299 : vector<16x1xi1> to vector<16x1xi1>
    %301 = vector.broadcast %300 : vector<16x1xi1> to vector<16x32xi1>
    %302 = vector.broadcast %cst_135 : f32 to vector<16x32xf32>
    %303 = arith.select %301, %290, %302 : vector<16x32xi1>, vector<16x32xf32>
    %c12_i32 = arith.constant 12 : i32
    %304 = tpu.dynamic_rotate %188 by %c12_i32 dim 0 : vector<16x32xf32>, i32 -> vector<16x32xf32>
    %c4_i32_136 = arith.constant 4 : i32
    %305 = vector.broadcast %c4_i32_136 : i32 to vector<16x1xi32>
    %306 = arith.addi %205, %305 : vector<16x1xi32>
    %c0_i32_137 = arith.constant 0 : i32
    %307 = vector.broadcast %c0_i32_137 : i32 to vector<16x1xi32>
    %308 = arith.cmpi sge, %306, %307 : vector<16x1xi32>
    %c4_i32_138 = arith.constant 4 : i32
    %309 = vector.broadcast %c4_i32_138 : i32 to vector<16x1xi32>
    %310 = arith.addi %205, %309 : vector<16x1xi32>
    %c8_i32_139 = arith.constant 8 : i32
    %311 = vector.broadcast %c8_i32_139 : i32 to vector<16x1xi32>
    %312 = arith.cmpi slt, %310, %311 : vector<16x1xi32>
    %313 = arith.andi %308, %312 : vector<16x1xi1>
    %cst_140 = arith.constant 0.000000e+00 : f32
    %314 = vector.shape_cast %313 : vector<16x1xi1> to vector<16x1xi1>
    %315 = vector.broadcast %314 : vector<16x1xi1> to vector<16x32xi1>
    %316 = vector.broadcast %cst_140 : f32 to vector<16x32xf32>
    %317 = arith.select %315, %304, %316 : vector<16x32xi1>, vector<16x32xf32>
    %318 = tpu.concatenate %219, %233, %247, %261, %188, %275, %289, %303, %317 in 1 : vector<16x32xf32>, vector<16x32xf32>, vector<16x32xf32>, vector<16x32xf32>, vector<16x32xf32>, vector<16x32xf32>, vector<16x32xf32>, vector<16x32xf32>, vector<16x32xf32> -> vector<16x288xf32>
    %319 = arith.truncf %318 : vector<16x288xf32> to vector<16x288xbf16>
    %c0_141 = arith.constant 0 : index
    %c0_142 = arith.constant 0 : index
    %320 = vector.load %arg18[%c0_141, %c0_142] : memref<288x64xbf16, #tpu.memory_space<vmem>>, vector<288x64xbf16>
    %cst_143 = arith.constant dense<0.000000e+00> : vector<16x64xf32>
    %321 = tpu.matmul %319, %320, %cst_143 {dimension_numbers = #tpu.dot_dimension_numbers<[1], [0], [0], [1], [0, 0, 1, 1], [], []>} : vector<16x288xbf16>, vector<288x64xbf16>, vector<16x64xf32> -> vector<16x64xf32>
    %c0_144 = arith.constant 0 : index
    %c0_145 = arith.constant 0 : index
    %322 = vector.load %arg19[%c0_144, %c0_145] : memref<1x64xf32, #tpu.memory_space<vmem>>, vector<1x64xf32>
    %323 = vector.broadcast %322 : vector<1x64xf32> to vector<16x64xf32>
    %324 = arith.addf %321, %323 : vector<16x64xf32>
    %cst_146 = arith.constant 0.000000e+00 : f32
    %325 = vector.broadcast %cst_146 : f32 to vector<16x64xf32>
    %326 = arith.maximumf %324, %325 : vector<16x64xf32>
    %327 = arith.truncf %326 : vector<16x64xf32> to vector<16x64xbf16>
    %c0_147 = arith.constant 0 : index
    %c0_148 = arith.constant 0 : index
    %328 = vector.load %arg20[%c0_147, %c0_148] : memref<64x32xbf16, #tpu.memory_space<vmem>>, vector<64x32xbf16>
    %cst_149 = arith.constant dense<0.000000e+00> : vector<16x32xf32>
    %329 = tpu.matmul %327, %328, %cst_149 {dimension_numbers = #tpu.dot_dimension_numbers<[1], [0], [0], [1], [0, 0, 1, 1], [], []>} : vector<16x64xbf16>, vector<64x32xbf16>, vector<16x32xf32> -> vector<16x32xf32>
    %c0_150 = arith.constant 0 : index
    %c0_151 = arith.constant 0 : index
    %330 = vector.load %arg21[%c0_150, %c0_151] : memref<1x32xf32, #tpu.memory_space<vmem>>, vector<1x32xf32>
    %331 = vector.broadcast %330 : vector<1x32xf32> to vector<16x32xf32>
    %332 = arith.addf %329, %331 : vector<16x32xf32>
    %333 = arith.addf %332, %188 : vector<16x32xf32>
    %334 = vector.broadcast %3 : vector<16x1xf32> to vector<16x32xf32>
    %335 = arith.mulf %333, %334 : vector<16x32xf32>
    %336 = vector.shape_cast %335 : vector<16x32xf32> to vector<2x8x32xf32>
    %c0_152 = arith.constant 0 : index
    %c0_153 = arith.constant 0 : index
    %c0_154 = arith.constant 0 : index
    %337 = vector.load %arg22[%c0_152, %c0_153, %c0_154] : memref<2x8x32xf32, #tpu.memory_space<vmem>>, vector<2x8x32xf32>
    tpu.vector_store %arg22[%c0_152, %c0_153, %c0_154], %336 {strides = array<i32>} : memref<2x8x32xf32, #tpu.memory_space<vmem>>, vector<2x8x32xf32>,
    return
  }
  func.func @transform_0(%arg0: i32) -> (i32, i32, i32) {
    %c0_i32 = arith.constant 0 : i32
    %c0_i32_0 = arith.constant 0 : i32
    %c0_i32_1 = arith.constant 0 : i32
    %c0_i32_2 = arith.constant 0 : i32
    return %c0_i32, %c0_i32_0, %c0_i32_1 : i32, i32, i32
  }
  func.func @transform_1(%arg0: i32) -> (i32, i32, i32) {
    %c0_i32 = arith.constant 0 : i32
    %c0_i32_0 = arith.constant 0 : i32
    %c0_i32_1 = arith.constant 0 : i32
    %c0_i32_2 = arith.constant 0 : i32
    return %c0_i32, %c0_i32_0, %c0_i32_1 : i32, i32, i32
  }
  func.func @transform_2(%arg0: i32) -> (i32, i32, i32) {
    %c0_i32 = arith.constant 0 : i32
    %c0_i32_0 = arith.constant 0 : i32
    %c0_i32_1 = arith.constant 0 : i32
    %c0_i32_2 = arith.constant 0 : i32
    return %c0_i32, %c0_i32_0, %c0_i32_1 : i32, i32, i32
  }
  func.func @transform_3(%arg0: i32) -> (i32, i32) {
    %c0_i32 = arith.constant 0 : i32
    %c0_i32_0 = arith.constant 0 : i32
    %c0_i32_1 = arith.constant 0 : i32
    return %c0_i32, %c0_i32_0 : i32, i32
  }
  func.func @transform_4(%arg0: i32) -> (i32, i32) {
    %c0_i32 = arith.constant 0 : i32
    %c0_i32_0 = arith.constant 0 : i32
    %c0_i32_1 = arith.constant 0 : i32
    return %c0_i32, %c0_i32_0 : i32, i32
  }
  func.func @transform_5(%arg0: i32) -> (i32, i32, i32) {
    %c0_i32 = arith.constant 0 : i32
    %c0_i32_0 = arith.constant 0 : i32
    %c0_i32_1 = arith.constant 0 : i32
    %c0_i32_2 = arith.constant 0 : i32
    return %c0_i32, %c0_i32_0, %c0_i32_1 : i32, i32, i32
  }
  func.func @transform_6(%arg0: i32) -> (i32, i32, i32) {
    %c0_i32 = arith.constant 0 : i32
    %c0_i32_0 = arith.constant 0 : i32
    %c0_i32_1 = arith.constant 0 : i32
    %c0_i32_2 = arith.constant 0 : i32
    return %c0_i32, %c0_i32_0, %c0_i32_1 : i32, i32, i32
  }
  func.func @transform_7(%arg0: i32) -> (i32, i32, i32) {
    %c0_i32 = arith.constant 0 : i32
    %c0_i32_0 = arith.constant 0 : i32
    %c0_i32_1 = arith.constant 0 : i32
    %c0_i32_2 = arith.constant 0 : i32
    return %c0_i32, %c0_i32_0, %c0_i32_1 : i32, i32, i32
  }
  func.func @transform_8(%arg0: i32) -> (i32, i32, i32) {
    %c0_i32 = arith.constant 0 : i32
    %c0_i32_0 = arith.constant 0 : i32
    %c0_i32_1 = arith.constant 0 : i32
    %c0_i32_2 = arith.constant 0 : i32
    return %c0_i32, %c0_i32_0, %c0_i32_1 : i32, i32, i32
  }
  func.func @transform_9(%arg0: i32) -> (i32, i32, i32) {
    %c0_i32 = arith.constant 0 : i32
    %c0_i32_0 = arith.constant 0 : i32
    %c0_i32_1 = arith.constant 0 : i32
    %c0_i32_2 = arith.constant 0 : i32
    return %c0_i32, %c0_i32_0, %c0_i32_1 : i32, i32, i32
  }
  func.func @transform_10(%arg0: i32) -> (i32, i32, i32) {
    %c0_i32 = arith.constant 0 : i32
    %c0_i32_0 = arith.constant 0 : i32
    %c0_i32_1 = arith.constant 0 : i32
    %c0_i32_2 = arith.constant 0 : i32
    return %c0_i32, %c0_i32_0, %c0_i32_1 : i32, i32, i32
  }
  func.func @transform_11(%arg0: i32) -> (i32, i32, i32) {
    %c0_i32 = arith.constant 0 : i32
    %c0_i32_0 = arith.constant 0 : i32
    %c0_i32_1 = arith.constant 0 : i32
    %c0_i32_2 = arith.constant 0 : i32
    return %c0_i32, %c0_i32_0, %c0_i32_1 : i32, i32, i32
  }
  func.func @transform_12(%arg0: i32) -> (i32, i32) {
    %c0_i32 = arith.constant 0 : i32
    %c0_i32_0 = arith.constant 0 : i32
    %c0_i32_1 = arith.constant 0 : i32
    return %c0_i32, %c0_i32_0 : i32, i32
  }
  func.func @transform_13(%arg0: i32) -> (i32, i32) {
    %c0_i32 = arith.constant 0 : i32
    %c0_i32_0 = arith.constant 0 : i32
    %c0_i32_1 = arith.constant 0 : i32
    return %c0_i32, %c0_i32_0 : i32, i32
  }
  func.func @transform_14(%arg0: i32) -> (i32, i32) {
    %c0_i32 = arith.constant 0 : i32
    %c0_i32_0 = arith.constant 0 : i32
    %c0_i32_1 = arith.constant 0 : i32
    return %c0_i32, %c0_i32_0 : i32, i32
  }
  func.func @transform_15(%arg0: i32) -> (i32, i32) {
    %c0_i32 = arith.constant 0 : i32
    %c0_i32_0 = arith.constant 0 : i32
    %c0_i32_1 = arith.constant 0 : i32
    return %c0_i32, %c0_i32_0 : i32, i32
  }
  func.func @transform_16(%arg0: i32) -> (i32, i32) {
    %c0_i32 = arith.constant 0 : i32
    %c0_i32_0 = arith.constant 0 : i32
    %c0_i32_1 = arith.constant 0 : i32
    return %c0_i32, %c0_i32_0 : i32, i32
  }
  func.func @transform_17(%arg0: i32) -> (i32, i32) {
    %c0_i32 = arith.constant 0 : i32
    %c0_i32_0 = arith.constant 0 : i32
    %c0_i32_1 = arith.constant 0 : i32
    return %c0_i32, %c0_i32_0 : i32, i32
  }
  func.func @transform_18(%arg0: i32) -> (i32, i32) {
    %c0_i32 = arith.constant 0 : i32
    %c0_i32_0 = arith.constant 0 : i32
    %c0_i32_1 = arith.constant 0 : i32
    return %c0_i32, %c0_i32_0 : i32, i32
  }
  func.func @transform_19(%arg0: i32) -> (i32, i32) {
    %c0_i32 = arith.constant 0 : i32
    %c0_i32_0 = arith.constant 0 : i32
    %c0_i32_1 = arith.constant 0 : i32
    return %c0_i32, %c0_i32_0 : i32, i32
  }
  func.func @transform_20(%arg0: i32) -> (i32, i32) {
    %c0_i32 = arith.constant 0 : i32
    %c0_i32_0 = arith.constant 0 : i32
    %c0_i32_1 = arith.constant 0 : i32
    return %c0_i32, %c0_i32_0 : i32, i32
  }
  func.func @transform_21(%arg0: i32) -> (i32, i32, i32) {
    %c0_i32 = arith.constant 0 : i32
    %c0_i32_0 = arith.constant 0 : i32
    %c0_i32_1 = arith.constant 0 : i32
    %c0_i32_2 = arith.constant 0 : i32
    return %c0_i32, %c0_i32_0, %c0_i32_1 : i32, i32, i32
  }
  func.func @transform_22(%arg0: i32) -> (i32, i32, i32, i32) {
    %c0_i32 = arith.constant 0 : i32
    %c0_i32_0 = arith.constant 0 : i32
    %c0_i32_1 = arith.constant 0 : i32
    %c0_i32_2 = arith.constant 0 : i32
    %c0_i32_3 = arith.constant 0 : i32
    return %c0_i32, %c0_i32_0, %c0_i32_1, %c0_i32_2 : i32, i32, i32, i32
  }
}

</mosaic_0001>

<llo_original>
// kernel: tpu_custom_call.1
$region0: #{tpu_custom_call.1}
  #allocation0 [shape = 'u32[]', space=smem, size = 0x4, offset = 0x4, fixed_abs, tag = 'smem constant byte address 0x4 - core index']
  #allocation1 [shape = 'u32[144,128]{1,0:T(1,128)}', space=vmem, size = 0x12000, scoped, tag = 'internal scratch']
  %s0 = inlined_call_operand.vmem [shape: f32[2,8,32], index: 0, kind: input, shape index: {}]
  %s1 = inlined_call_operand.vmem [shape: f32[2,8,1], index: 1, kind: input, shape index: {}]
  %s2 = inlined_call_operand.vmem [shape: f32[2,8,8], index: 2, kind: input, shape index: {}]
  %s3 = inlined_call_operand.vmem [shape: f32[1,32], index: 3, kind: input, shape index: {}]
  %s4 = inlined_call_operand.vmem [shape: f32[1,32], index: 4, kind: input, shape index: {}]
  %s5 = inlined_call_operand.vmem [shape: bf16[2,32,16], index: 5, kind: input, shape index: {}]
  %s6 = inlined_call_operand.vmem [shape: f32[2,1,16], index: 6, kind: input, shape index: {}]
  %s7 = inlined_call_operand.vmem [shape: bf16[2,32,16], index: 7, kind: input, shape index: {}]
  %s8 = inlined_call_operand.vmem [shape: f32[2,1,16], index: 8, kind: input, shape index: {}]
  %s9 = inlined_call_operand.vmem [shape: bf16[2,32,16], index: 9, kind: input, shape index: {}]
  %s10 = inlined_call_operand.vmem [shape: f32[2,1,16], index: 10, kind: input, shape index: {}]
  %s11 = inlined_call_operand.vmem [shape: bf16[2,16,32], index: 11, kind: input, shape index: {}]
  %s12 = inlined_call_operand.vmem [shape: f32[1,32], index: 12, kind: input, shape index: {}]
  %s13 = inlined_call_operand.vmem [shape: f32[1,32], index: 13, kind: input, shape index: {}]
  %s14 = inlined_call_operand.vmem [shape: f32[1,32], index: 14, kind: input, shape index: {}]
  %s15 = inlined_call_operand.vmem [shape: f32[1,32], index: 15, kind: input, shape index: {}]
  %s16 = inlined_call_operand.vmem [shape: f32[1,32], index: 16, kind: input, shape index: {}]
  %s17 = inlined_call_operand.vmem [shape: bf16[288,64], index: 17, kind: input, shape index: {}]
  %s18 = inlined_call_operand.vmem [shape: f32[1,64], index: 18, kind: input, shape index: {}]
  %s19 = inlined_call_operand.vmem [shape: bf16[64,32], index: 19, kind: input, shape index: {}]
  %s20 = inlined_call_operand.vmem [shape: f32[1,32], index: 20, kind: input, shape index: {}]
  %s21 = inlined_call_operand.hbm [shape: f32[2,8,32], index: 21, kind: output, shape index: {0}]
  %s22 = inlined_call_operand.hbm [shape: f32[2,2,8,8], index: 22, kind: output, shape index: {1}]
  %23 = xla_tuple %s21, %s22
  %s24 = sld [smem:[#allocation0]]
  $region102: #{tpu_custom_call.1} parent=0
    _
  %s26 = ssub.s32 1, %s24
  %s27 = scalar_select 0, %s26, %s24
  $region1: #{tpu_custom_call.1} parent=0
    #allocation2 [shape = 'u8[8192]{0}', space=vmem, size = 0x2000, scoped, tag = 'output window, operand 0, single buffered']
    #allocation3 [shape = 's32[1]{0}', space=sflag, size = 0x4, scoped, tag = 'scoped memory for tpu_custom_call.1']
    #allocation4 [shape = 'u8[16384]{0}', space=vmem, size = 0x4000, scoped, tag = 'output window, operand 1, single buffered']
    #allocation5 [shape = 's32[1]{0}', space=sflag, size = 0x4, scoped, tag = 'scoped memory for tpu_custom_call.1']
    %28 = vsyncpa [#allocation3], 0
    %29 = vsyncpa [#allocation5], 0
    // Predicated region
    $region2: #{tpu_custom_call.1} parent=1 // pred_check
      _
    $region3: #{tpu_custom_call.1} parent=1 // pred_check_branch
      %31 = sbr.rel (0) target = $region5
    $region4: #{tpu_custom_call.1} parent=1 // pred_region
      _
    $region5: #{tpu_custom_call.1} parent=1 // pred_fallthru
      _
    // Predicated region
    $region6: #{tpu_custom_call.1} parent=1 // pred_check
      _
    $region7: #{tpu_custom_call.1} parent=1 // pred_check_branch
      %33 = sbr.rel (0) target = $region9
    $region8: #{tpu_custom_call.1} parent=1 // pred_region
      _
    $region9: #{tpu_custom_call.1} parent=1 // pred_fallthru
      _
    // Predicated region
    $region10: #{tpu_custom_call.1} parent=1 // pred_check
      _
    $region11: #{tpu_custom_call.1} parent=1 // pred_check_branch
      %35 = sbr.rel (0) target = $region13
    $region12: #{tpu_custom_call.1} parent=1 // pred_region
      _
    $region13: #{tpu_custom_call.1} parent=1 // pred_fallthru
      _
    // Predicated region
    $region14: #{tpu_custom_call.1} parent=1 // pred_check
      _
    $region15: #{tpu_custom_call.1} parent=1 // pred_check_branch
      %37 = sbr.rel (0) target = $region17
    $region16: #{tpu_custom_call.1} parent=1 // pred_region
      _
    $region17: #{tpu_custom_call.1} parent=1 // pred_fallthru
      _
    // Predicated region
    $region18: #{tpu_custom_call.1} parent=1 // pred_check
      _
    $region19: #{tpu_custom_call.1} parent=1 // pred_check_branch
      %39 = sbr.rel (0) target = $region21
    $region20: #{tpu_custom_call.1} parent=1 // pred_region
      _
    $region21: #{tpu_custom_call.1} parent=1 // pred_fallthru
      _
    // Predicated region
    $region22: #{tpu_custom_call.1} parent=1 // pred_check
      _
    $region23: #{tpu_custom_call.1} parent=1 // pred_check_branch
      %41 = sbr.rel (0) target = $region25
    $region24: #{tpu_custom_call.1} parent=1 // pred_region
      _
    $region25: #{tpu_custom_call.1} parent=1 // pred_fallthru
      _
    // Predicated region
    $region26: #{tpu_custom_call.1} parent=1 // pred_check
      _
    $region27: #{tpu_custom_call.1} parent=1 // pred_check_branch
      %43 = sbr.rel (0) target = $region29
    $region28: #{tpu_custom_call.1} parent=1 // pred_region
      _
    $region29: #{tpu_custom_call.1} parent=1 // pred_fallthru
      _
    // Predicated region
    $region30: #{tpu_custom_call.1} parent=1 // pred_check
      _
    $region31: #{tpu_custom_call.1} parent=1 // pred_check_branch
      %45 = sbr.rel (0) target = $region33
    $region32: #{tpu_custom_call.1} parent=1 // pred_region
      _
    $region33: #{tpu_custom_call.1} parent=1 // pred_fallthru
      _
    // Predicated region
    $region34: #{tpu_custom_call.1} parent=1 // pred_check
      _
    $region35: #{tpu_custom_call.1} parent=1 // pred_check_branch
      %47 = sbr.rel (0) target = $region37
    $region36: #{tpu_custom_call.1} parent=1 // pred_region
      _
    $region37: #{tpu_custom_call.1} parent=1 // pred_fallthru
      _
    // Predicated region
    $region38: #{tpu_custom_call.1} parent=1 // pred_check
      _
    $region39: #{tpu_custom_call.1} parent=1 // pred_check_branch
      %49 = sbr.rel (0) target = $region41
    $region40: #{tpu_custom_call.1} parent=1 // pred_region
      _
    $region41: #{tpu_custom_call.1} parent=1 // pred_fallthru
      _
    // Predicated region
    $region42: #{tpu_custom_call.1} parent=1 // pred_check
      _
    $region43: #{tpu_custom_call.1} parent=1 // pred_check_branch
      %51 = sbr.rel (0) target = $region45
    $region44: #{tpu_custom_call.1} parent=1 // pred_region
      _
    $region45: #{tpu_custom_call.1} parent=1 // pred_fallthru
      _
    // Predicated region
    $region46: #{tpu_custom_call.1} parent=1 // pred_check
      _
    $region47: #{tpu_custom_call.1} parent=1 // pred_check_branch
      %53 = sbr.rel (0) target = $region49
    $region48: #{tpu_custom_call.1} parent=1 // pred_region
      _
    $region49: #{tpu_custom_call.1} parent=1 // pred_fallthru
      _
    // Predicated region
    $region50: #{tpu_custom_call.1} parent=1 // pred_check
      _
    $region51: #{tpu_custom_call.1} parent=1 // pred_check_branch
      %55 = sbr.rel (0) target = $region53
    $region52: #{tpu_custom_call.1} parent=1 // pred_region
      _
    $region53: #{tpu_custom_call.1} parent=1 // pred_fallthru
      _
    // Predicated region
    $region54: #{tpu_custom_call.1} parent=1 // pred_check
      _
    $region55: #{tpu_custom_call.1} parent=1 // pred_check_branch
      %57 = sbr.rel (0) target = $region57
    $region56: #{tpu_custom_call.1} parent=1 // pred_region
      _
    $region57: #{tpu_custom_call.1} parent=1 // pred_fallthru
      _
    // Predicated region
    $region58: #{tpu_custom_call.1} parent=1 // pred_check
      _
    $region59: #{tpu_custom_call.1} parent=1 // pred_check_branch
      %59 = sbr.rel (0) target = $region61
    $region60: #{tpu_custom_call.1} parent=1 // pred_region
      _
    $region61: #{tpu_custom_call.1} parent=1 // pred_fallthru
      _
    // Predicated region
    $region62: #{tpu_custom_call.1} parent=1 // pred_check
      _
    $region63: #{tpu_custom_call.1} parent=1 // pred_check_branch
      %61 = sbr.rel (0) target = $region65
    $region64: #{tpu_custom_call.1} parent=1 // pred_region
      _
    $region65: #{tpu_custom_call.1} parent=1 // pred_fallthru
      _
    // Predicated region
    $region66: #{tpu_custom_call.1} parent=1 // pred_check
      _
    $region67: #{tpu_custom_call.1} parent=1 // pred_check_branch
      %63 = sbr.rel (0) target = $region69
    $region68: #{tpu_custom_call.1} parent=1 // pred_region
      _
    $region69: #{tpu_custom_call.1} parent=1 // pred_fallthru
      _
    // Predicated region
    $region70: #{tpu_custom_call.1} parent=1 // pred_check
      _
    $region71: #{tpu_custom_call.1} parent=1 // pred_check_branch
      %65 = sbr.rel (0) target = $region73
    $region72: #{tpu_custom_call.1} parent=1 // pred_region
      _
    $region73: #{tpu_custom_call.1} parent=1 // pred_fallthru
      _
    // Predicated region
    $region74: #{tpu_custom_call.1} parent=1 // pred_check
      _
    $region75: #{tpu_custom_call.1} parent=1 // pred_check_branch
      %67 = sbr.rel (0) target = $region77
    $region76: #{tpu_custom_call.1} parent=1 // pred_region
      _
    $region77: #{tpu_custom_call.1} parent=1 // pred_fallthru
      _
    // Predicated region
    $region78: #{tpu_custom_call.1} parent=1 // pred_check
      _
    $region79: #{tpu_custom_call.1} parent=1 // pred_check_branch
      %69 = sbr.rel (0) target = $region81
    $region80: #{tpu_custom_call.1} parent=1 // pred_region
      _
    $region81: #{tpu_custom_call.1} parent=1 // pred_fallthru
      _
    // Predicated region
    $region82: #{tpu_custom_call.1} parent=1 // pred_check
      _
    $region83: #{tpu_custom_call.1} parent=1 // pred_check_branch
      %71 = sbr.rel (0) target = $region85
    $region84: #{tpu_custom_call.1} parent=1 // pred_region
      _
    $region85: #{tpu_custom_call.1} parent=1 // pred_fallthru
      _
    %v73 = vld [vmem:[%s0] sm:$0xff]
    %v74 = vld [vmem:[%s0 + $0x8] sm:$0xff]
    %v75 = vld [vmem:[%s1] sm:$0xff]
    %v76 = vld [vmem:[%s1 + $0x8] sm:$0xff]
    %v77 = vld [vmem:[%s2] sm:$0xff]
    %v78 = vld [vmem:[%s2 + $0x8] sm:$0xff]
    %v79 = vld [vmem:[%s3] sm:$0x1]
    %v80 = vld [vmem:[%s4] sm:$0x1]
    %vm81 = vcmask 261120
    %v82 = vsel %vm81, %v73, 0.0
    %83 = vadd.xlane.f32.xlu0 %v82
    %v84 = vpop.xlane.xlu0 %83
    %v85 = vsel %vm81, %v74, 0.0
    %86 = vadd.xlane.f32.xlu0 %v85
    %v87 = vpop.xlane.xlu0 %86
    %v88 = vrcp.pop 32.0
    %v89 = vmul.f32 %v84, %v88
    %v90 = vmul.f32 %v87, %v88
    %v91 = vsub.f32 %v73, %v89
    %v92 = vsub.f32 %v74, %v90
    %v93 = vmul.f32 %v91, %v91
    %v94 = vmul.f32 %v92, %v92
    %v95 = vsel %vm81, %v93, 0.0
    %96 = vadd.xlane.f32.xlu0 %v95
    %v97 = vpop.xlane.xlu0 %96
    %v98 = vsel %vm81, %v94, 0.0
    %99 = vadd.xlane.f32.xlu0 %v98
    %v100 = vpop.xlane.xlu0 %99
    %v101 = vmul.f32 %v97, %v88
    %v102 = vmul.f32 %v100, %v88
    %v103 = vadd.f32 %v101, 1e-05
    %v104 = vadd.f32 %v102, 1e-05
    %v105 = vrsqrt.pop %v103
    %v106 = vrsqrt.pop %v104
    %v107 = vmul.f32 %v91, %v105
    %v108 = vmul.f32 %v92, %v106
    %v110 = vlaneseq
    %v111 = vshrl.u32 %v110, 7
    %v112 = vsub.s32 0, %v111
    %v113 = vrot.slane %v79, %v112
    %v115 = vmul.f32 %v107, %v113
    %v116 = vmul.f32 %v108, %v113
    %v118 = vlaneseq
    %v119 = vshrl.u32 %v118, 7
    %v120 = vsub.s32 0, %v119
    %v121 = vrot.slane %v80, %v120
    %v123 = vadd.f32 %v115, %v121
    %v124 = vadd.f32 %v116, %v121
    %v125 = vpack.c.bf16 %v124, %v123
    %v126 = vmul.f32 %v77, -1e+30
    %v127 = vmul.f32 %v78, -1e+30
    %v128 = vld [vmem:[%s5] sm:$0xf]
    %v129 = vld [vmem:[%s5 + $0x4] sm:$0xf]
    %v130 = vld [vmem:[%s5 + $0x8] sm:$0xf]
    %v131 = vld [vmem:[%s5 + $0xc] sm:$0xf]
    %v132 = vld [vmem:[%s6] sm:$0x1]
    %v134 = vlaneseq
    %v135 = vshrl.u32 %v134, 7
    %v136 = vsub.s32 0, %v135
    %v137 = vrot.slane %v132, %v136
    %v143 = vunpack.c.l.b16 %v128
    %v144 = vunpack.c.l.b16 %v129
    %v145 = vunpack.c.l.b16 %v130
    %v146 = vunpack.c.l.b16 %v131
    %v147 = vpack.c.b16 %v144, %v143
    %v148 = vpack.c.b16 %v146, %v145
    %v152 = vsel %vm81, %v125, 0
    %154 = vmatprep.subr.bf16.mxu0 0
    %155 = vmatpush1.bf16.msra.mxu0 %v147
    %156 = vmatprep.subr.bf16.mxu0 0
    %157 = vmatpush1.bf16.msra.mxu0 %v148
    %158 = vmatprep.subr.bf16.mxu0 0
    %159 = vmatpush1.bf16.msra.mxu0 0
    %160 = vmatprep.subr.bf16.mxu0 0
    %161 = vmatpush1.bf16.msra.mxu0 0
    %162 = vmatprep.subr.bf16.mxu0 0
    %163 = vmatpush1.bf16.msra.mxu0 0
    %164 = vmatprep.subr.bf16.mxu0 0
    %165 = vmatpush1.bf16.msra.mxu0 0
    %166 = vmatprep.subr.bf16.mxu0 0
    %167 = vmatpush1.bf16.msra.mxu0 0
    %168 = vmatprep.subr.bf16.mxu0 0
    %169 = vmatpush1.bf16.msra.mxu0 0
    %170 = vmatprep.subr.bf16.mxu0 0
    %171 = vmatpush1.bf16.msra.mxu0 0
    %172 = vmatprep.subr.bf16.mxu0 0
    %173 = vmatpush1.bf16.msra.mxu0 0
    %174 = vmatprep.subr.bf16.mxu0 0
    %175 = vmatpush1.bf16.msra.mxu0 0
    %176 = vmatprep.subr.bf16.mxu0 0
    %177 = vmatpush1.bf16.msra.mxu0 0
    %178 = vmatprep.subr.bf16.mxu0 0
    %179 = vmatpush1.bf16.msra.mxu0 0
    %180 = vmatprep.subr.bf16.mxu0 0
    %181 = vmatpush1.bf16.msra.mxu0 0
    %182 = vmatprep.subr.bf16.mxu0 0
    %183 = vmatpush1.bf16.msra.mxu0 0
    %184 = vmatprep.subr.bf16.mxu0 0
    %185 = vmatpush1.bf16.msra.mxu0 0
    %186 = vmatprep.mubr.bf16.mxu0 0
    %187 = vmatmul.mubr.bf16.gmra.mrb[0].mxu0 %v152
    %v188 = vpop.f32.mrb[0].mxu0
    %v189 = vadd.f32 %v137, %v188
    %v190 = vpop.f32.mrb[0].mxu0
    %v191 = vpop.f32.mrb[0].mxu0
    %v192 = vadd.f32 %v137, %v191
    %v193 = vpop.f32.mrb[0].mxu0
    %194 = vdwg.mxu0
    %v195 = vld [vmem:[%s7] sm:$0xf]
    %v196 = vld [vmem:[%s7 + $0x4] sm:$0xf]
    %v197 = vld [vmem:[%s7 + $0x8] sm:$0xf]
    %v198 = vld [vmem:[%s7 + $0xc] sm:$0xf]
    %v199 = vld [vmem:[%s8] sm:$0x1]
    %v201 = vlaneseq
    %v202 = vshrl.u32 %v201, 7
    %v203 = vsub.s32 0, %v202
    %v204 = vrot.slane %v199, %v203
    %v210 = vunpack.c.l.b16 %v195
    %v211 = vunpack.c.l.b16 %v196
    %v212 = vunpack.c.l.b16 %v197
    %v213 = vunpack.c.l.b16 %v198
    %v214 = vpack.c.b16 %v211, %v210
    %v215 = vpack.c.b16 %v213, %v212
    %218 = vmatprep.subr.bf16.mxu0 0
    %219 = vmatpush1.bf16.msra.mxu0 %v214
    %220 = vmatprep.subr.bf16.mxu0 0
    %221 = vmatpush1.bf16.msra.mxu0 %v215
    %222 = vmatprep.subr.bf16.mxu0 0
    %223 = vmatpush1.bf16.msra.mxu0 0
    %224 = vmatprep.subr.bf16.mxu0 0
    %225 = vmatpush1.bf16.msra.mxu0 0
    %226 = vmatprep.subr.bf16.mxu0 0
    %227 = vmatpush1.bf16.msra.mxu0 0
    %228 = vmatprep.subr.bf16.mxu0 0
    %229 = vmatpush1.bf16.msra.mxu0 0
    %230 = vmatprep.subr.bf16.mxu0 0
    %231 = vmatpush1.bf16.msra.mxu0 0
    %232 = vmatprep.subr.bf16.mxu0 0
    %233 = vmatpush1.bf16.msra.mxu0 0
    %234 = vmatprep.subr.bf16.mxu0 0
    %235 = vmatpush1.bf16.msra.mxu0 0
    %236 = vmatprep.subr.bf16.mxu0 0
    %237 = vmatpush1.bf16.msra.mxu0 0
    %238 = vmatprep.subr.bf16.mxu0 0
    %239 = vmatpush1.bf16.msra.mxu0 0
    %240 = vmatprep.subr.bf16.mxu0 0
    %241 = vmatpush1.bf16.msra.mxu0 0
    %242 = vmatprep.subr.bf16.mxu0 0
    %243 = vmatpush1.bf16.msra.mxu0 0
    %244 = vmatprep.subr.bf16.mxu0 0
    %245 = vmatpush1.bf16.msra.mxu0 0
    %246 = vmatprep.subr.bf16.mxu0 0
    %247 = vmatpush1.bf16.msra.mxu0 0
    %248 = vmatprep.subr.bf16.mxu0 0
    %249 = vmatpush1.bf16.msra.mxu0 0
    %250 = vmatprep.mubr.bf16.mxu0 0
    %251 = vmatmul.mubr.bf16.gmra.mrb[0].mxu0 %v152
    %v252 = vpop.f32.mrb[0].mxu0
    %v253 = vadd.f32 %v204, %v252
    %v254 = vpop.f32.mrb[0].mxu0
    %v255 = vpop.f32.mrb[0].mxu0
    %v256 = vadd.f32 %v204, %v255
    %v257 = vpop.f32.mrb[0].mxu0
    %258 = vdwg.mxu0
    %v259 = vld [vmem:[%s9] sm:$0xf]
    %v260 = vld [vmem:[%s9 + $0x4] sm:$0xf]
    %v261 = vld [vmem:[%s9 + $0x8] sm:$0xf]
    %v262 = vld [vmem:[%s9 + $0xc] sm:$0xf]
    %v263 = vld [vmem:[%s10] sm:$0x1]
    %v265 = vlaneseq
    %v266 = vshrl.u32 %v265, 7
    %v267 = vsub.s32 0, %v266
    %v268 = vrot.slane %v263, %v267
    %v274 = vunpack.c.l.b16 %v259
    %v275 = vunpack.c.l.b16 %v260
    %v276 = vunpack.c.l.b16 %v261
    %v277 = vunpack.c.l.b16 %v262
    %v278 = vpack.c.b16 %v275, %v274
    %v279 = vpack.c.b16 %v277, %v276
    %282 = vmatprep.subr.bf16.mxu0 0
    %283 = vmatpush1.bf16.msra.mxu0 %v278
    %284 = vmatprep.subr.bf16.mxu0 0
    %285 = vmatpush1.bf16.msra.mxu0 %v279
    %286 = vmatprep.subr.bf16.mxu0 0
    %287 = vmatpush1.bf16.msra.mxu0 0
    %288 = vmatprep.subr.bf16.mxu0 0
    %289 = vmatpush1.bf16.msra.mxu0 0
    %290 = vmatprep.subr.bf16.mxu0 0
    %291 = vmatpush1.bf16.msra.mxu0 0
    %292 = vmatprep.subr.bf16.mxu0 0
    %293 = vmatpush1.bf16.msra.mxu0 0
    %294 = vmatprep.subr.bf16.mxu0 0
    %295 = vmatpush1.bf16.msra.mxu0 0
    %296 = vmatprep.subr.bf16.mxu0 0
    %297 = vmatpush1.bf16.msra.mxu0 0
    %298 = vmatprep.subr.bf16.mxu0 0
    %299 = vmatpush1.bf16.msra.mxu0 0
    %300 = vmatprep.subr.bf16.mxu0 0
    %301 = vmatpush1.bf16.msra.mxu0 0
    %302 = vmatprep.subr.bf16.mxu0 0
    %303 = vmatpush1.bf16.msra.mxu0 0
    %304 = vmatprep.subr.bf16.mxu0 0
    %305 = vmatpush1.bf16.msra.mxu0 0
    %306 = vmatprep.subr.bf16.mxu0 0
    %307 = vmatpush1.bf16.msra.mxu0 0
    %308 = vmatprep.subr.bf16.mxu0 0
    %309 = vmatpush1.bf16.msra.mxu0 0
    %310 = vmatprep.subr.bf16.mxu0 0
    %311 = vmatpush1.bf16.msra.mxu0 0
    %312 = vmatprep.subr.bf16.mxu0 0
    %313 = vmatpush1.bf16.msra.mxu0 0
    %314 = vmatprep.mubr.bf16.mxu0 0
    %315 = vmatmul.mubr.bf16.gmra.mrb[0].mxu0 %v152
    %v316 = vpop.f32.mrb[0].mxu0
    %v317 = vadd.f32 %v268, %v316
    %v318 = vpop.f32.mrb[0].mxu0
    %v319 = vpop.f32.mrb[0].mxu0
    %v320 = vadd.f32 %v268, %v319
    %v321 = vpop.f32.mrb[0].mxu0
    %322 = vdwg.mxu0
    %v323 = vpack.c.bf16 %v189, %v189
    %v324 = vpack.c.bf16 %v192, %v192
    %v325 = vpack.c.bf16 %v253, %v253
    %v326 = vpack.c.bf16 %v256, %v256
    %v327 = vpack.c.bf16 %v317, %v317
    %v328 = vpack.c.bf16 %v320, %v320
    %vm329 = vcmask 130048
    %v331 = vsel %vm329, %v323, 0
    %v334 = vsel %vm329, %v325, 0
    %336 = vmatprep.subr.bf16.mxu0 0
    %337 = vmatpush1.bf16.xpose.msra.mxu0 %v334
    %338 = vmatprep.subr.bf16.mxu0 0
    %339 = vmatpush1.bf16.xpose.msra.mxu0 0
    %340 = vmatprep.subr.bf16.mxu0 0
    %341 = vmatpush1.bf16.xpose.msra.mxu0 0
    %342 = vmatprep.subr.bf16.mxu0 0
    %343 = vmatpush1.bf16.xpose.msra.mxu0 0
    %344 = vmatprep.subr.bf16.mxu0 0
    %345 = vmatpush1.bf16.xpose.msra.mxu0 0
    %346 = vmatprep.subr.bf16.mxu0 0
    %347 = vmatpush1.bf16.xpose.msra.mxu0 0
    %348 = vmatprep.subr.bf16.mxu0 0
    %349 = vmatpush1.bf16.xpose.msra.mxu0 0
    %350 = vmatprep.subr.bf16.mxu0 0
    %351 = vmatpush1.bf16.xpose.msra.mxu0 0
    %352 = vmatprep.subr.bf16.mxu0 0
    %353 = vmatpush1.bf16.xpose.msra.mxu0 0
    %354 = vmatprep.subr.bf16.mxu0 0
    %355 = vmatpush1.bf16.xpose.msra.mxu0 0
    %356 = vmatprep.subr.bf16.mxu0 0
    %357 = vmatpush1.bf16.xpose.msra.mxu0 0
    %358 = vmatprep.subr.bf16.mxu0 0
    %359 = vmatpush1.bf16.xpose.msra.mxu0 0
    %360 = vmatprep.subr.bf16.mxu0 0
    %361 = vmatpush1.bf16.xpose.msra.mxu0 0
    %362 = vmatprep.subr.bf16.mxu0 0
    %363 = vmatpush1.bf16.xpose.msra.mxu0 0
    %364 = vmatprep.subr.bf16.mxu0 0
    %365 = vmatpush1.bf16.xpose.msra.mxu0 0
    %366 = vmatprep.subr.bf16.mxu0 0
    %367 = vmatpush1.bf16.xpose.msra.mxu0 0
    %368 = vmatprep.mubr.bf16.mxu0 0
    %369 = vmatmul.mubr.bf16.gmra.mrb[0].mxu0 %v331
    %v370 = vpop.f32.mrb[0].mxu0
    %v371 = vadd.f32 0.0, %v370
    %v372 = vpop.f32.mrb[0].mxu0
    %v373 = vpop.f32.mrb[0].mxu0
    %v374 = vpop.f32.mrb[0].mxu0
    %375 = vdwg.mxu0
    %v377 = vsel %vm329, %v324, 0
    %v380 = vsel %vm329, %v326, 0
    %382 = vmatprep.subr.bf16.mxu0 0
    %383 = vmatpush1.bf16.xpose.msra.mxu0 %v380
    %384 = vmatprep.subr.bf16.mxu0 0
    %385 = vmatpush1.bf16.xpose.msra.mxu0 0
    %386 = vmatprep.subr.bf16.mxu0 0
    %387 = vmatpush1.bf16.xpose.msra.mxu0 0
    %388 = vmatprep.subr.bf16.mxu0 0
    %389 = vmatpush1.bf16.xpose.msra.mxu0 0
    %390 = vmatprep.subr.bf16.mxu0 0
    %391 = vmatpush1.bf16.xpose.msra.mxu0 0
    %392 = vmatprep.subr.bf16.mxu0 0
    %393 = vmatpush1.bf16.xpose.msra.mxu0 0
    %394 = vmatprep.subr.bf16.mxu0 0
    %395 = vmatpush1.bf16.xpose.msra.mxu0 0
    %396 = vmatprep.subr.bf16.mxu0 0
    %397 = vmatpush1.bf16.xpose.msra.mxu0 0
    %398 = vmatprep.subr.bf16.mxu0 0
    %399 = vmatpush1.bf16.xpose.msra.mxu0 0
    %400 = vmatprep.subr.bf16.mxu0 0
    %401 = vmatpush1.bf16.xpose.msra.mxu0 0
    %402 = vmatprep.subr.bf16.mxu0 0
    %403 = vmatpush1.bf16.xpose.msra.mxu0 0
    %404 = vmatprep.subr.bf16.mxu0 0
    %405 = vmatpush1.bf16.xpose.msra.mxu0 0
    %406 = vmatprep.subr.bf16.mxu0 0
    %407 = vmatpush1.bf16.xpose.msra.mxu0 0
    %408 = vmatprep.subr.bf16.mxu0 0
    %409 = vmatpush1.bf16.xpose.msra.mxu0 0
    %410 = vmatprep.subr.bf16.mxu0 0
    %411 = vmatpush1.bf16.xpose.msra.mxu0 0
    %412 = vmatprep.subr.bf16.mxu0 0
    %413 = vmatpush1.bf16.xpose.msra.mxu0 0
    %414 = vmatprep.mubr.bf16.mxu0 0
    %415 = vmatmul.mubr.bf16.gmra.mrb[0].mxu0 %v377
    %v416 = vpop.f32.mrb[0].mxu0
    %v417 = vadd.f32 0.0, %v416
    %v418 = vpop.f32.mrb[0].mxu0
    %v419 = vpop.f32.mrb[0].mxu0
    %v420 = vpop.f32.mrb[0].mxu0
    %421 = vdwg.mxu0
    %v422 = vmul.f32 %v371, 0.25
    %v423 = vmul.f32 %v417, 0.25
    %v424 = vadd.f32 %v422, %v126
    %v425 = vadd.f32 %v423, %v127
    %vm426 = vcmask 64512
    %v427 = vsel %vm426, %v424, -inf
    %428 = vmax.xlane.f32.xlu0 %v427
    %v429 = vpop.xlane.xlu0 %428
    %v430 = vsel %vm426, %v425, -inf
    %431 = vmax.xlane.f32.xlu0 %v430
    %v432 = vpop.xlane.xlu0 %431
    %v433 = vsub.f32 %v424, %v429
    %v434 = vsub.f32 %v425, %v432
    %v435 = vmul.f32 %v433, 1.442695
    %v436 = vpow.pop %v435
    %v437 = vmul.f32 %v434, 1.442695
    %v438 = vpow.pop %v437
    %v439 = vsel %vm426, %v436, 0.0
    %440 = vadd.xlane.f32.xlu0 %v439
    %v441 = vpop.xlane.xlu0 %440
    %v442 = vsel %vm426, %v438, 0.0
    %443 = vadd.xlane.f32.xlu0 %v442
    %v444 = vpop.xlane.xlu0 %443
    %v445 = vrcp.pop %v441
    %v446 = vrcp.pop %v444
    %v447 = vmul.f32 %v436, %v445
    %v448 = vmul.f32 %v438, %v446
    %v449 = vpack.c.bf16 %v447, %v447
    %v450 = vpack.c.bf16 %v448, %v448
    %v452 = vsel %vm426, %v449, 0
    %vm454 = vcmask 1043456
    %v456 = vsel %vm454, %v327, 0
    %458 = vmatprep.subr.bf16.mxu0 0
    %459 = vmatpush1.bf16.msra.mxu0 %v456
    %460 = vmatprep.subr.bf16.mxu0 0
    %461 = vmatpush1.bf16.msra.mxu0 0
    %462 = vmatprep.subr.bf16.mxu0 0
    %463 = vmatpush1.bf16.msra.mxu0 0
    %464 = vmatprep.subr.bf16.mxu0 0
    %465 = vmatpush1.bf16.msra.mxu0 0
    %466 = vmatprep.subr.bf16.mxu0 0
    %467 = vmatpush1.bf16.msra.mxu0 0
    %468 = vmatprep.subr.bf16.mxu0 0
    %469 = vmatpush1.bf16.msra.mxu0 0
    %470 = vmatprep.subr.bf16.mxu0 0
    %471 = vmatpush1.bf16.msra.mxu0 0
    %472 = vmatprep.subr.bf16.mxu0 0
    %473 = vmatpush1.bf16.msra.mxu0 0
    %474 = vmatprep.subr.bf16.mxu0 0
    %475 = vmatpush1.bf16.msra.mxu0 0
    %476 = vmatprep.subr.bf16.mxu0 0
    %477 = vmatpush1.bf16.msra.mxu0 0
    %478 = vmatprep.subr.bf16.mxu0 0
    %479 = vmatpush1.bf16.msra.mxu0 0
    %480 = vmatprep.subr.bf16.mxu0 0
    %481 = vmatpush1.bf16.msra.mxu0 0
    %482 = vmatprep.subr.bf16.mxu0 0
    %483 = vmatpush1.bf16.msra.mxu0 0
    %484 = vmatprep.subr.bf16.mxu0 0
    %485 = vmatpush1.bf16.msra.mxu0 0
    %486 = vmatprep.subr.bf16.mxu0 0
    %487 = vmatpush1.bf16.msra.mxu0 0
    %488 = vmatprep.subr.bf16.mxu0 0
    %489 = vmatpush1.bf16.msra.mxu0 0
    %490 = vmatprep.mubr.bf16.mxu0 0
    %491 = vmatmul.mubr.bf16.gmra.mrb[0].mxu0 %v452
    %v492 = vpop.f32.mrb[0].mxu0
    %v493 = vadd.f32 0.0, %v492
    %v494 = vpop.f32.mrb[0].mxu0
    %v495 = vpop.f32.mrb[0].mxu0
    %v496 = vpop.f32.mrb[0].mxu0
    %497 = vdwg.mxu0
    %v499 = vsel %vm426, %v450, 0
    %v502 = vsel %vm454, %v328, 0
    %504 = vmatprep.subr.bf16.mxu0 0
    %505 = vmatpush1.bf16.msra.mxu0 %v502
    %506 = vmatprep.subr.bf16.mxu0 0
    %507 = vmatpush1.bf16.msra.mxu0 0
    %508 = vmatprep.subr.bf16.mxu0 0
    %509 = vmatpush1.bf16.msra.mxu0 0
    %510 = vmatprep.subr.bf16.mxu0 0
    %511 = vmatpush1.bf16.msra.mxu0 0
    %512 = vmatprep.subr.bf16.mxu0 0
    %513 = vmatpush1.bf16.msra.mxu0 0
    %514 = vmatprep.subr.bf16.mxu0 0
    %515 = vmatpush1.bf16.msra.mxu0 0
    %516 = vmatprep.subr.bf16.mxu0 0
    %517 = vmatpush1.bf16.msra.mxu0 0
    %518 = vmatprep.subr.bf16.mxu0 0
    %519 = vmatpush1.bf16.msra.mxu0 0
    %520 = vmatprep.subr.bf16.mxu0 0
    %521 = vmatpush1.bf16.msra.mxu0 0
    %522 = vmatprep.subr.bf16.mxu0 0
    %523 = vmatpush1.bf16.msra.mxu0 0
    %524 = vmatprep.subr.bf16.mxu0 0
    %525 = vmatpush1.bf16.msra.mxu0 0
    %526 = vmatprep.subr.bf16.mxu0 0
    %527 = vmatpush1.bf16.msra.mxu0 0
    %528 = vmatprep.subr.bf16.mxu0 0
    %529 = vmatpush1.bf16.msra.mxu0 0
    %530 = vmatprep.subr.bf16.mxu0 0
    %531 = vmatpush1.bf16.msra.mxu0 0
    %532 = vmatprep.subr.bf16.mxu0 0
    %533 = vmatpush1.bf16.msra.mxu0 0
    %534 = vmatprep.subr.bf16.mxu0 0
    %535 = vmatpush1.bf16.msra.mxu0 0
    %536 = vmatprep.mubr.bf16.mxu0 0
    %537 = vmatmul.mubr.bf16.gmra.mrb[0].mxu0 %v499
    %v538 = vpop.f32.mrb[0].mxu0
    %v539 = vadd.f32 0.0, %v538
    %v540 = vpop.f32.mrb[0].mxu0
    %v541 = vpop.f32.mrb[0].mxu0
    %v542 = vpop.f32.mrb[0].mxu0
    %543 = vdwg.mxu0
    %v544 = vpack.c.bf16 %v539, %v493
    %v545 = vld [vmem:[%s11] sm:$0xf]
    %v546 = vld [vmem:[%s11 + $0x4] sm:$0xf]
    %s547 = scalar_lea.vmem %s5, 16
    %v548 = vld [vmem:[%s547] sm:$0xf]
    %v549 = vld [vmem:[%s547 + $0x4] sm:$0xf]
    %v550 = vld [vmem:[%s547 + $0x8] sm:$0xf]
    %v551 = vld [vmem:[%s547 + $0xc] sm:$0xf]
    %s552 = scalar_lea.vmem %s6, 1
    %v553 = vld [vmem:[%s552] sm:$0x1]
    %v555 = vlaneseq
    %v556 = vshrl.u32 %v555, 7
    %v557 = vsub.s32 0, %v556
    %v558 = vrot.slane %v553, %v557
    %v564 = vunpack.c.l.b16 %v548
    %v565 = vunpack.c.l.b16 %v549
    %v566 = vunpack.c.l.b16 %v550
    %v567 = vunpack.c.l.b16 %v551
    %v568 = vpack.c.b16 %v565, %v564
    %v569 = vpack.c.b16 %v567, %v566
    %572 = vmatprep.subr.bf16.mxu0 0
    %573 = vmatpush1.bf16.msra.mxu0 %v568
    %574 = vmatprep.subr.bf16.mxu0 0
    %575 = vmatpush1.bf16.msra.mxu0 %v569
    %576 = vmatprep.subr.bf16.mxu0 0
    %577 = vmatpush1.bf16.msra.mxu0 0
    %578 = vmatprep.subr.bf16.mxu0 0
    %579 = vmatpush1.bf16.msra.mxu0 0
    %580 = vmatprep.subr.bf16.mxu0 0
    %581 = vmatpush1.bf16.msra.mxu0 0
    %582 = vmatprep.subr.bf16.mxu0 0
    %583 = vmatpush1.bf16.msra.mxu0 0
    %584 = vmatprep.subr.bf16.mxu0 0
    %585 = vmatpush1.bf16.msra.mxu0 0
    %586 = vmatprep.subr.bf16.mxu0 0
    %587 = vmatpush1.bf16.msra.mxu0 0
    %588 = vmatprep.subr.bf16.mxu0 0
    %589 = vmatpush1.bf16.msra.mxu0 0
    %590 = vmatprep.subr.bf16.mxu0 0
    %591 = vmatpush1.bf16.msra.mxu0 0
    %592 = vmatprep.subr.bf16.mxu0 0
    %593 = vmatpush1.bf16.msra.mxu0 0
    %594 = vmatprep.subr.bf16.mxu0 0
    %595 = vmatpush1.bf16.msra.mxu0 0
    %596 = vmatprep.subr.bf16.mxu0 0
    %597 = vmatpush1.bf16.msra.mxu0 0
    %598 = vmatprep.subr.bf16.mxu0 0
    %599 = vmatpush1.bf16.msra.mxu0 0
    %600 = vmatprep.subr.bf16.mxu0 0
    %601 = vmatpush1.bf16.msra.mxu0 0
    %602 = vmatprep.subr.bf16.mxu0 0
    %603 = vmatpush1.bf16.msra.mxu0 0
    %604 = vmatprep.mubr.bf16.mxu0 0
    %605 = vmatmul.mubr.bf16.gmra.mrb[0].mxu0 %v152
    %v606 = vpop.f32.mrb[0].mxu0
    %v607 = vadd.f32 %v558, %v606
    %v608 = vpop.f32.mrb[0].mxu0
    %v609 = vpop.f32.mrb[0].mxu0
    %v610 = vadd.f32 %v558, %v609
    %v611 = vpop.f32.mrb[0].mxu0
    %612 = vdwg.mxu0
    %s613 = scalar_lea.vmem %s7, 16
    %v614 = vld [vmem:[%s613] sm:$0xf]
    %v615 = vld [vmem:[%s613 + $0x4] sm:$0xf]
    %v616 = vld [vmem:[%s613 + $0x8] sm:$0xf]
    %v617 = vld [vmem:[%s613 + $0xc] sm:$0xf]
    %s618 = scalar_lea.vmem %s8, 1
    %v619 = vld [vmem:[%s618] sm:$0x1]
    %v621 = vlaneseq
    %v622 = vshrl.u32 %v621, 7
    %v623 = vsub.s32 0, %v622
    %v624 = vrot.slane %v619, %v623
    %v630 = vunpack.c.l.b16 %v614
    %v631 = vunpack.c.l.b16 %v615
    %v632 = vunpack.c.l.b16 %v616
    %v633 = vunpack.c.l.b16 %v617
    %v634 = vpack.c.b16 %v631, %v630
    %v635 = vpack.c.b16 %v633, %v632
    %638 = vmatprep.subr.bf16.mxu0 0
    %639 = vmatpush1.bf16.msra.mxu0 %v634
    %640 = vmatprep.subr.bf16.mxu0 0
    %641 = vmatpush1.bf16.msra.mxu0 %v635
    %642 = vmatprep.subr.bf16.mxu0 0
    %643 = vmatpush1.bf16.msra.mxu0 0
    %644 = vmatprep.subr.bf16.mxu0 0
    %645 = vmatpush1.bf16.msra.mxu0 0
    %646 = vmatprep.subr.bf16.mxu0 0
    %647 = vmatpush1.bf16.msra.mxu0 0
    %648 = vmatprep.subr.bf16.mxu0 0
    %649 = vmatpush1.bf16.msra.mxu0 0
    %650 = vmatprep.subr.bf16.mxu0 0
    %651 = vmatpush1.bf16.msra.mxu0 0
    %652 = vmatprep.subr.bf16.mxu0 0
    %653 = vmatpush1.bf16.msra.mxu0 0
    %654 = vmatprep.subr.bf16.mxu0 0
    %655 = vmatpush1.bf16.msra.mxu0 0
    %656 = vmatprep.subr.bf16.mxu0 0
    %657 = vmatpush1.bf16.msra.mxu0 0
    %658 = vmatprep.subr.bf16.mxu0 0
    %659 = vmatpush1.bf16.msra.mxu0 0
    %660 = vmatprep.subr.bf16.mxu0 0
    %661 = vmatpush1.bf16.msra.mxu0 0
    %662 = vmatprep.subr.bf16.mxu0 0
    %663 = vmatpush1.bf16.msra.mxu0 0
    %664 = vmatprep.subr.bf16.mxu0 0
    %665 = vmatpush1.bf16.msra.mxu0 0
    %666 = vmatprep.subr.bf16.mxu0 0
    %667 = vmatpush1.bf16.msra.mxu0 0
    %668 = vmatprep.subr.bf16.mxu0 0
    %669 = vmatpush1.bf16.msra.mxu0 0
    %670 = vmatprep.mubr.bf16.mxu0 0
    %671 = vmatmul.mubr.bf16.gmra.mrb[0].mxu0 %v152
    %v672 = vpop.f32.mrb[0].mxu0
    %v673 = vadd.f32 %v624, %v672
    %v674 = vpop.f32.mrb[0].mxu0
    %v675 = vpop.f32.mrb[0].mxu0
    %v676 = vadd.f32 %v624, %v675
    %v677 = vpop.f32.mrb[0].mxu0
    %678 = vdwg.mxu0
    %s679 = scalar_lea.vmem %s9, 16
    %v680 = vld [vmem:[%s679] sm:$0xf]
    %v681 = vld [vmem:[%s679 + $0x4] sm:$0xf]
    %v682 = vld [vmem:[%s679 + $0x8] sm:$0xf]
    %v683 = vld [vmem:[%s679 + $0xc] sm:$0xf]
    %s684 = scalar_lea.vmem %s10, 1
    %v685 = vld [vmem:[%s684] sm:$0x1]
    %v687 = vlaneseq
    %v688 = vshrl.u32 %v687, 7
    %v689 = vsub.s32 0, %v688
    %v690 = vrot.slane %v685, %v689
    %v696 = vunpack.c.l.b16 %v680
    %v697 = vunpack.c.l.b16 %v681
    %v698 = vunpack.c.l.b16 %v682
    %v699 = vunpack.c.l.b16 %v683
    %v700 = vpack.c.b16 %v697, %v696
    %v701 = vpack.c.b16 %v699, %v698
    %704 = vmatprep.subr.bf16.mxu0 0
    %705 = vmatpush1.bf16.msra.mxu0 %v700
    %706 = vmatprep.subr.bf16.mxu0 0
    %707 = vmatpush1.bf16.msra.mxu0 %v701
    %708 = vmatprep.subr.bf16.mxu0 0
    %709 = vmatpush1.bf16.msra.mxu0 0
    %710 = vmatprep.subr.bf16.mxu0 0
    %711 = vmatpush1.bf16.msra.mxu0 0
    %712 = vmatprep.subr.bf16.mxu0 0
    %713 = vmatpush1.bf16.msra.mxu0 0
    %714 = vmatprep.subr.bf16.mxu0 0
    %715 = vmatpush1.bf16.msra.mxu0 0
    %716 = vmatprep.subr.bf16.mxu0 0
    %717 = vmatpush1.bf16.msra.mxu0 0
    %718 = vmatprep.subr.bf16.mxu0 0
    %719 = vmatpush1.bf16.msra.mxu0 0
    %720 = vmatprep.subr.bf16.mxu0 0
    %721 = vmatpush1.bf16.msra.mxu0 0
    %722 = vmatprep.subr.bf16.mxu0 0
    %723 = vmatpush1.bf16.msra.mxu0 0
    %724 = vmatprep.subr.bf16.mxu0 0
    %725 = vmatpush1.bf16.msra.mxu0 0
    %726 = vmatprep.subr.bf16.mxu0 0
    %727 = vmatpush1.bf16.msra.mxu0 0
    %728 = vmatprep.subr.bf16.mxu0 0
    %729 = vmatpush1.bf16.msra.mxu0 0
    %730 = vmatprep.subr.bf16.mxu0 0
    %731 = vmatpush1.bf16.msra.mxu0 0
    %732 = vmatprep.subr.bf16.mxu0 0
    %733 = vmatpush1.bf16.msra.mxu0 0
    %734 = vmatprep.subr.bf16.mxu0 0
    %735 = vmatpush1.bf16.msra.mxu0 0
    %736 = vmatprep.mubr.bf16.mxu0 0
    %737 = vmatmul.mubr.bf16.gmra.mrb[0].mxu0 %v152
    %v738 = vpop.f32.mrb[0].mxu0
    %v739 = vadd.f32 %v690, %v738
    %v740 = vpop.f32.mrb[0].mxu0
    %v741 = vpop.f32.mrb[0].mxu0
    %v742 = vadd.f32 %v690, %v741
    %v743 = vpop.f32.mrb[0].mxu0
    %744 = vdwg.mxu0
    %v745 = vpack.c.bf16 %v607, %v607
    %v746 = vpack.c.bf16 %v610, %v610
    %v747 = vpack.c.bf16 %v673, %v673
    %v748 = vpack.c.bf16 %v676, %v676
    %v749 = vpack.c.bf16 %v739, %v739
    %v750 = vpack.c.bf16 %v742, %v742
    %v752 = vsel %vm329, %v745, 0
    %v755 = vsel %vm329, %v747, 0
    %757 = vmatprep.subr.bf16.mxu0 0
    %758 = vmatpush1.bf16.xpose.msra.mxu0 %v755
    %759 = vmatprep.subr.bf16.mxu0 0
    %760 = vmatpush1.bf16.xpose.msra.mxu0 0
    %761 = vmatprep.subr.bf16.mxu0 0
    %762 = vmatpush1.bf16.xpose.msra.mxu0 0
    %763 = vmatprep.subr.bf16.mxu0 0
    %764 = vmatpush1.bf16.xpose.msra.mxu0 0
    %765 = vmatprep.subr.bf16.mxu0 0
    %766 = vmatpush1.bf16.xpose.msra.mxu0 0
    %767 = vmatprep.subr.bf16.mxu0 0
    %768 = vmatpush1.bf16.xpose.msra.mxu0 0
    %769 = vmatprep.subr.bf16.mxu0 0
    %770 = vmatpush1.bf16.xpose.msra.mxu0 0
    %771 = vmatprep.subr.bf16.mxu0 0
    %772 = vmatpush1.bf16.xpose.msra.mxu0 0
    %773 = vmatprep.subr.bf16.mxu0 0
    %774 = vmatpush1.bf16.xpose.msra.mxu0 0
    %775 = vmatprep.subr.bf16.mxu0 0
    %776 = vmatpush1.bf16.xpose.msra.mxu0 0
    %777 = vmatprep.subr.bf16.mxu0 0
    %778 = vmatpush1.bf16.xpose.msra.mxu0 0
    %779 = vmatprep.subr.bf16.mxu0 0
    %780 = vmatpush1.bf16.xpose.msra.mxu0 0
    %781 = vmatprep.subr.bf16.mxu0 0
    %782 = vmatpush1.bf16.xpose.msra.mxu0 0
    %783 = vmatprep.subr.bf16.mxu0 0
    %784 = vmatpush1.bf16.xpose.msra.mxu0 0
    %785 = vmatprep.subr.bf16.mxu0 0
    %786 = vmatpush1.bf16.xpose.msra.mxu0 0
    %787 = vmatprep.subr.bf16.mxu0 0
    %788 = vmatpush1.bf16.xpose.msra.mxu0 0
    %789 = vmatprep.mubr.bf16.mxu0 0
    %790 = vmatmul.mubr.bf16.gmra.mrb[0].mxu0 %v752
    %v791 = vpop.f32.mrb[0].mxu0
    %v792 = vadd.f32 0.0, %v791
    %v793 = vpop.f32.mrb[0].mxu0
    %v794 = vpop.f32.mrb[0].mxu0
    %v795 = vpop.f32.mrb[0].mxu0
    %796 = vdwg.mxu0
    %v798 = vsel %vm329, %v746, 0
    %v801 = vsel %vm329, %v748, 0
    %803 = vmatprep.subr.bf16.mxu0 0
    %804 = vmatpush1.bf16.xpose.msra.mxu0 %v801
    %805 = vmatprep.subr.bf16.mxu0 0
    %806 = vmatpush1.bf16.xpose.msra.mxu0 0
    %807 = vmatprep.subr.bf16.mxu0 0
    %808 = vmatpush1.bf16.xpose.msra.mxu0 0
    %809 = vmatprep.subr.bf16.mxu0 0
    %810 = vmatpush1.bf16.xpose.msra.mxu0 0
    %811 = vmatprep.subr.bf16.mxu0 0
    %812 = vmatpush1.bf16.xpose.msra.mxu0 0
    %813 = vmatprep.subr.bf16.mxu0 0
    %814 = vmatpush1.bf16.xpose.msra.mxu0 0
    %815 = vmatprep.subr.bf16.mxu0 0
    %816 = vmatpush1.bf16.xpose.msra.mxu0 0
    %817 = vmatprep.subr.bf16.mxu0 0
    %818 = vmatpush1.bf16.xpose.msra.mxu0 0
    %819 = vmatprep.subr.bf16.mxu0 0
    %820 = vmatpush1.bf16.xpose.msra.mxu0 0
    %821 = vmatprep.subr.bf16.mxu0 0
    %822 = vmatpush1.bf16.xpose.msra.mxu0 0
    %823 = vmatprep.subr.bf16.mxu0 0
    %824 = vmatpush1.bf16.xpose.msra.mxu0 0
    %825 = vmatprep.subr.bf16.mxu0 0
    %826 = vmatpush1.bf16.xpose.msra.mxu0 0
    %827 = vmatprep.subr.bf16.mxu0 0
    %828 = vmatpush1.bf16.xpose.msra.mxu0 0
    %829 = vmatprep.subr.bf16.mxu0 0
    %830 = vmatpush1.bf16.xpose.msra.mxu0 0
    %831 = vmatprep.subr.bf16.mxu0 0
    %832 = vmatpush1.bf16.xpose.msra.mxu0 0
    %833 = vmatprep.subr.bf16.mxu0 0
    %834 = vmatpush1.bf16.xpose.msra.mxu0 0
    %835 = vmatprep.mubr.bf16.mxu0 0
    %836 = vmatmul.mubr.bf16.gmra.mrb[0].mxu0 %v798
    %v837 = vpop.f32.mrb[0].mxu0
    %v838 = vadd.f32 0.0, %v837
    %v839 = vpop.f32.mrb[0].mxu0
    %v840 = vpop.f32.mrb[0].mxu0
    %v841 = vpop.f32.mrb[0].mxu0
    %842 = vdwg.mxu0
    %v843 = vmul.f32 %v792, 0.25
    %v844 = vmul.f32 %v838, 0.25
    %v845 = vadd.f32 %v843, %v126
    %v846 = vadd.f32 %v844, %v127
    %v847 = vsel %vm426, %v845, -inf
    %848 = vmax.xlane.f32.xlu0 %v847
    %v849 = vpop.xlane.xlu0 %848
    %v850 = vsel %vm426, %v846, -inf
    %851 = vmax.xlane.f32.xlu0 %v850
    %v852 = vpop.xlane.xlu0 %851
    %v853 = vsub.f32 %v845, %v849
    %v854 = vsub.f32 %v846, %v852
    %v855 = vmul.f32 %v853, 1.442695
    %v856 = vpow.pop %v855
    %v857 = vmul.f32 %v854, 1.442695
    %v858 = vpow.pop %v857
    %v859 = vsel %vm426, %v856, 0.0
    %860 = vadd.xlane.f32.xlu0 %v859
    %v861 = vpop.xlane.xlu0 %860
    %v862 = vsel %vm426, %v858, 0.0
    %863 = vadd.xlane.f32.xlu0 %v862
    %v864 = vpop.xlane.xlu0 %863
    %v865 = vrcp.pop %v861
    %v866 = vrcp.pop %v864
    %v867 = vmul.f32 %v856, %v865
    %v868 = vmul.f32 %v858, %v866
    %v869 = vpack.c.bf16 %v867, %v867
    %v870 = vpack.c.bf16 %v868, %v868
    %v872 = vsel %vm426, %v869, 0
    %v875 = vsel %vm454, %v749, 0
    %877 = vmatprep.subr.bf16.mxu0 0
    %878 = vmatpush1.bf16.msra.mxu0 %v875
    %879 = vmatprep.subr.bf16.mxu0 0
    %880 = vmatpush1.bf16.msra.mxu0 0
    %881 = vmatprep.subr.bf16.mxu0 0
    %882 = vmatpush1.bf16.msra.mxu0 0
    %883 = vmatprep.subr.bf16.mxu0 0
    %884 = vmatpush1.bf16.msra.mxu0 0
    %885 = vmatprep.subr.bf16.mxu0 0
    %886 = vmatpush1.bf16.msra.mxu0 0
    %887 = vmatprep.subr.bf16.mxu0 0
    %888 = vmatpush1.bf16.msra.mxu0 0
    %889 = vmatprep.subr.bf16.mxu0 0
    %890 = vmatpush1.bf16.msra.mxu0 0
    %891 = vmatprep.subr.bf16.mxu0 0
    %892 = vmatpush1.bf16.msra.mxu0 0
    %893 = vmatprep.subr.bf16.mxu0 0
    %894 = vmatpush1.bf16.msra.mxu0 0
    %895 = vmatprep.subr.bf16.mxu0 0
    %896 = vmatpush1.bf16.msra.mxu0 0
    %897 = vmatprep.subr.bf16.mxu0 0
    %898 = vmatpush1.bf16.msra.mxu0 0
    %899 = vmatprep.subr.bf16.mxu0 0
    %900 = vmatpush1.bf16.msra.mxu0 0
    %901 = vmatprep.subr.bf16.mxu0 0
    %902 = vmatpush1.bf16.msra.mxu0 0
    %903 = vmatprep.subr.bf16.mxu0 0
    %904 = vmatpush1.bf16.msra.mxu0 0
    %905 = vmatprep.subr.bf16.mxu0 0
    %906 = vmatpush1.bf16.msra.mxu0 0
    %907 = vmatprep.subr.bf16.mxu0 0
    %908 = vmatpush1.bf16.msra.mxu0 0
    %909 = vmatprep.mubr.bf16.mxu0 0
    %910 = vmatmul.mubr.bf16.gmra.mrb[0].mxu0 %v872
    %v911 = vpop.f32.mrb[0].mxu0
    %v912 = vadd.f32 0.0, %v911
    %v913 = vpop.f32.mrb[0].mxu0
    %v914 = vpop.f32.mrb[0].mxu0
    %v915 = vpop.f32.mrb[0].mxu0
    %916 = vdwg.mxu0
    %v918 = vsel %vm426, %v870, 0
    %v921 = vsel %vm454, %v750, 0
    %923 = vmatprep.subr.bf16.mxu0 0
    %924 = vmatpush1.bf16.msra.mxu0 %v921
    %925 = vmatprep.subr.bf16.mxu0 0
    %926 = vmatpush1.bf16.msra.mxu0 0
    %927 = vmatprep.subr.bf16.mxu0 0
    %928 = vmatpush1.bf16.msra.mxu0 0
    %929 = vmatprep.subr.bf16.mxu0 0
    %930 = vmatpush1.bf16.msra.mxu0 0
    %931 = vmatprep.subr.bf16.mxu0 0
    %932 = vmatpush1.bf16.msra.mxu0 0
    %933 = vmatprep.subr.bf16.mxu0 0
    %934 = vmatpush1.bf16.msra.mxu0 0
    %935 = vmatprep.subr.bf16.mxu0 0
    %936 = vmatpush1.bf16.msra.mxu0 0
    %937 = vmatprep.subr.bf16.mxu0 0
    %938 = vmatpush1.bf16.msra.mxu0 0
    %939 = vmatprep.subr.bf16.mxu0 0
    %940 = vmatpush1.bf16.msra.mxu0 0
    %941 = vmatprep.subr.bf16.mxu0 0
    %942 = vmatpush1.bf16.msra.mxu0 0
    %943 = vmatprep.subr.bf16.mxu0 0
    %944 = vmatpush1.bf16.msra.mxu0 0
    %945 = vmatprep.subr.bf16.mxu0 0
    %946 = vmatpush1.bf16.msra.mxu0 0
    %947 = vmatprep.subr.bf16.mxu0 0
    %948 = vmatpush1.bf16.msra.mxu0 0
    %949 = vmatprep.subr.bf16.mxu0 0
    %950 = vmatpush1.bf16.msra.mxu0 0
    %951 = vmatprep.subr.bf16.mxu0 0
    %952 = vmatpush1.bf16.msra.mxu0 0
    %953 = vmatprep.subr.bf16.mxu0 0
    %954 = vmatpush1.bf16.msra.mxu0 0
    %955 = vmatprep.mubr.bf16.mxu0 0
    %956 = vmatmul.mubr.bf16.gmra.mrb[0].mxu0 %v918
    %v957 = vpop.f32.mrb[0].mxu0
    %v958 = vadd.f32 0.0, %v957
    %v959 = vpop.f32.mrb[0].mxu0
    %v960 = vpop.f32.mrb[0].mxu0
    %v961 = vpop.f32.mrb[0].mxu0
    %962 = vdwg.mxu0
    %v963 = vpack.c.bf16 %v958, %v912
    %s964 = scalar_lea.vmem %s11, 8
    %v965 = vld [vmem:[%s964] sm:$0xf]
    %v966 = vld [vmem:[%s964 + $0x4] sm:$0xf]
    %v969 = vunpack.c.l.b16 %v965
    %v970 = vunpack.c.l.b16 %v966
    %v971 = vpack.c.b16 %v970, %v969
    %v974 = vsel %vm329, %v963, 0
    %976 = vmatprep.subr.bf16.mxu0 0
    %977 = vmatpush1.bf16.msra.mxu0 %v971
    %978 = vmatprep.subr.bf16.mxu0 0
    %979 = vmatpush1.bf16.msra.mxu0 0
    %980 = vmatprep.subr.bf16.mxu0 0
    %981 = vmatpush1.bf16.msra.mxu0 0
    %982 = vmatprep.subr.bf16.mxu0 0
    %983 = vmatpush1.bf16.msra.mxu0 0
    %984 = vmatprep.subr.bf16.mxu0 0
    %985 = vmatpush1.bf16.msra.mxu0 0
    %986 = vmatprep.subr.bf16.mxu0 0
    %987 = vmatpush1.bf16.msra.mxu0 0
    %988 = vmatprep.subr.bf16.mxu0 0
    %989 = vmatpush1.bf16.msra.mxu0 0
    %990 = vmatprep.subr.bf16.mxu0 0
    %991 = vmatpush1.bf16.msra.mxu0 0
    %992 = vmatprep.subr.bf16.mxu0 0
    %993 = vmatpush1.bf16.msra.mxu0 0
    %994 = vmatprep.subr.bf16.mxu0 0
    %995 = vmatpush1.bf16.msra.mxu0 0
    %996 = vmatprep.subr.bf16.mxu0 0
    %997 = vmatpush1.bf16.msra.mxu0 0
    %998 = vmatprep.subr.bf16.mxu0 0
    %999 = vmatpush1.bf16.msra.mxu0 0
    %1000 = vmatprep.subr.bf16.mxu0 0
    %1001 = vmatpush1.bf16.msra.mxu0 0
    %1002 = vmatprep.subr.bf16.mxu0 0
    %1003 = vmatpush1.bf16.msra.mxu0 0
    %1004 = vmatprep.subr.bf16.mxu0 0
    %1005 = vmatpush1.bf16.msra.mxu0 0
    %1006 = vmatprep.subr.bf16.mxu0 0
    %1007 = vmatpush1.bf16.msra.mxu0 0
    %1008 = vmatprep.mubr.bf16.mxu0 0
    %1009 = vmatmul.mubr.bf16.gmra.mrb[0].mxu0 %v974
    %v1010 = vpop.f32.mrb[0].mxu0
    %v1011 = vadd.f32 0.0, %v1010
    %v1012 = vpop.f32.mrb[0].mxu0
    %v1013 = vpop.f32.mrb[0].mxu0
    %v1014 = vadd.f32 0.0, %v1013
    %v1015 = vpop.f32.mrb[0].mxu0
    %1016 = vdwg.mxu0
    %v1019 = vunpack.c.l.b16 %v545
    %v1020 = vunpack.c.l.b16 %v546
    %v1021 = vpack.c.b16 %v1020, %v1019
    %v1024 = vsel %vm329, %v544, 0
    %1026 = vmatprep.subr.bf16.mxu0 0
    %1027 = vmatpush1.bf16.msra.mxu0 %v1021
    %1028 = vmatprep.subr.bf16.mxu0 0
    %1029 = vmatpush1.bf16.msra.mxu0 0
    %1030 = vmatprep.subr.bf16.mxu0 0
    %1031 = vmatpush1.bf16.msra.mxu0 0
    %1032 = vmatprep.subr.bf16.mxu0 0
    %1033 = vmatpush1.bf16.msra.mxu0 0
    %1034 = vmatprep.subr.bf16.mxu0 0
    %1035 = vmatpush1.bf16.msra.mxu0 0
    %1036 = vmatprep.subr.bf16.mxu0 0
    %1037 = vmatpush1.bf16.msra.mxu0 0
    %1038 = vmatprep.subr.bf16.mxu0 0
    %1039 = vmatpush1.bf16.msra.mxu0 0
    %1040 = vmatprep.subr.bf16.mxu0 0
    %1041 = vmatpush1.bf16.msra.mxu0 0
    %1042 = vmatprep.subr.bf16.mxu0 0
    %1043 = vmatpush1.bf16.msra.mxu0 0
    %1044 = vmatprep.subr.bf16.mxu0 0
    %1045 = vmatpush1.bf16.msra.mxu0 0
    %1046 = vmatprep.subr.bf16.mxu0 0
    %1047 = vmatpush1.bf16.msra.mxu0 0
    %1048 = vmatprep.subr.bf16.mxu0 0
    %1049 = vmatpush1.bf16.msra.mxu0 0
    %1050 = vmatprep.subr.bf16.mxu0 0
    %1051 = vmatpush1.bf16.msra.mxu0 0
    %1052 = vmatprep.subr.bf16.mxu0 0
    %1053 = vmatpush1.bf16.msra.mxu0 0
    %1054 = vmatprep.subr.bf16.mxu0 0
    %1055 = vmatpush1.bf16.msra.mxu0 0
    %1056 = vmatprep.subr.bf16.mxu0 0
    %1057 = vmatpush1.bf16.msra.mxu0 0
    %1058 = vmatprep.mubr.bf16.mxu0 0
    %1059 = vmatmul.mubr.bf16.gmra.mrb[0].mxu0 %v1024
    %v1060 = vpop.f32.mrb[0].mxu0
    %v1061 = vadd.f32 %v1011, %v1060
    %v1062 = vpop.f32.mrb[0].mxu0
    %v1063 = vpop.f32.mrb[0].mxu0
    %v1064 = vadd.f32 %v1014, %v1063
    %v1065 = vpop.f32.mrb[0].mxu0
    %1066 = vdwg.mxu0
    %1067 = vst.msk [vmem:[#allocation4] sm:$0xff] %vm426, %v447
    %1068 = vst.msk [vmem:[#allocation4 + $0x8] sm:$0xff] %vm426, %v448
    %1069 = vst.msk [vmem:[#allocation4 + $0x10] sm:$0xff] %vm426, %v867
    %1070 = vst.msk [vmem:[#allocation4 + $0x18] sm:$0xff] %vm426, %v868
    %v1071 = vld [vmem:[%s12] sm:$0x1]
    %v1073 = vlaneseq
    %v1074 = vshrl.u32 %v1073, 7
    %v1075 = vsub.s32 0, %v1074
    %v1076 = vrot.slane %v1071, %v1075
    %v1078 = vadd.f32 %v1061, %v1076
    %v1079 = vadd.f32 %v1064, %v1076
    %v1080 = vadd.f32 %v1078, %v123
    %v1081 = vadd.f32 %v1079, %v124
    %v1082 = vld [vmem:[%s13] sm:$0x1]
    %v1083 = vld [vmem:[%s14] sm:$0x1]
    %v1084 = vsel %vm81, %v1080, 0.0
    %1085 = vadd.xlane.f32.xlu0 %v1084
    %v1086 = vpop.xlane.xlu0 %1085
    %v1087 = vsel %vm81, %v1081, 0.0
    %1088 = vadd.xlane.f32.xlu0 %v1087
    %v1089 = vpop.xlane.xlu0 %1088
    %v1090 = vmul.f32 %v1086, %v88
    %v1091 = vmul.f32 %v1089, %v88
    %v1092 = vsub.f32 %v1080, %v1090
    %v1093 = vsub.f32 %v1081, %v1091
    %v1094 = vmul.f32 %v1092, %v1092
    %v1095 = vmul.f32 %v1093, %v1093
    %v1096 = vsel %vm81, %v1094, 0.0
    %1097 = vadd.xlane.f32.xlu0 %v1096
    %v1098 = vpop.xlane.xlu0 %1097
    %v1099 = vsel %vm81, %v1095, 0.0
    %1100 = vadd.xlane.f32.xlu0 %v1099
    %v1101 = vpop.xlane.xlu0 %1100
    %v1102 = vmul.f32 %v1098, %v88
    %v1103 = vmul.f32 %v1101, %v88
    %v1104 = vadd.f32 %v1102, 1e-05
    %v1105 = vadd.f32 %v1103, 1e-05
    %v1106 = vrsqrt.pop %v1104
    %v1107 = vrsqrt.pop %v1105
    %v1108 = vmul.f32 %v1092, %v1106
    %v1109 = vmul.f32 %v1093, %v1107
    %v1111 = vlaneseq
    %v1112 = vshrl.u32 %v1111, 7
    %v1113 = vsub.s32 0, %v1112
    %v1114 = vrot.slane %v1082, %v1113
    %v1116 = vmul.f32 %v1108, %v1114
    %v1117 = vmul.f32 %v1109, %v1114
    %v1119 = vlaneseq
    %v1120 = vshrl.u32 %v1119, 7
    %v1121 = vsub.s32 0, %v1120
    %v1122 = vrot.slane %v1083, %v1121
    %v1124 = vadd.f32 %v1116, %v1122
    %v1125 = vadd.f32 %v1117, %v1122
    %v1126 = vld [vmem:[%s15] sm:$0x1]
    %v1127 = vld [vmem:[%s16] sm:$0x1]
    %v1128 = vsel %vm81, %v1124, 0.0
    %1129 = vadd.xlane.f32.xlu0 %v1128
    %v1130 = vpop.xlane.xlu0 %1129
    %v1131 = vsel %vm81, %v1125, 0.0
    %1132 = vadd.xlane.f32.xlu0 %v1131
    %v1133 = vpop.xlane.xlu0 %1132
    %v1134 = vmul.f32 %v1130, %v88
    %v1135 = vmul.f32 %v1133, %v88
    %v1136 = vsub.f32 %v1124, %v1134
    %v1137 = vsub.f32 %v1125, %v1135
    %v1138 = vmul.f32 %v1136, %v1136
    %v1139 = vmul.f32 %v1137, %v1137
    %v1140 = vsel %vm81, %v1138, 0.0
    %1141 = vadd.xlane.f32.xlu0 %v1140
    %v1142 = vpop.xlane.xlu0 %1141
    %v1143 = vsel %vm81, %v1139, 0.0
    %1144 = vadd.xlane.f32.xlu0 %v1143
    %v1145 = vpop.xlane.xlu0 %1144
    %v1146 = vmul.f32 %v1142, %v88
    %v1147 = vmul.f32 %v1145, %v88
    %v1148 = vadd.f32 %v1146, 1e-05
    %v1149 = vadd.f32 %v1147, 1e-05
    %v1150 = vrsqrt.pop %v1148
    %v1151 = vrsqrt.pop %v1149
    %v1152 = vmul.f32 %v1136, %v1150
    %v1153 = vmul.f32 %v1137, %v1151
    %v1155 = vlaneseq
    %v1156 = vshrl.u32 %v1155, 7
    %v1157 = vsub.s32 0, %v1156
    %v1158 = vrot.slane %v1126, %v1157
    %v1160 = vmul.f32 %v1152, %v1158
    %v1161 = vmul.f32 %v1153, %v1158
    %v1163 = vlaneseq
    %v1164 = vshrl.u32 %v1163, 7
    %v1165 = vsub.s32 0, %v1164
    %v1166 = vrot.slane %v1127, %v1165
    %v1168 = vadd.f32 %v1160, %v1166
    %v1169 = vadd.f32 %v1161, %v1166
    %1171 = vset.pattern.permute.xlu0 0
    %1172 = vperm.xlu0 %1171, %v75
    %v1173 = vpop.permute.xlu0 %1172
    %1176 = vset.pattern.permute.xlu0 0
    %1177 = vperm.xlu0 %1176, %v76
    %v1178 = vpop.permute.xlu0 %1177
    %v1180 = vmul.f32 %v1168, %v1173
    %v1181 = vmul.f32 %v1169, %v1178
    %v1182 = vlaneseq
    %v1183 = vshrl.u32 %v1182, 7
    %v1184 = vadd.s32 %v1183, 8
    %vm1185 = vcmp.lt.s32.totalorder %v1183, 0
    %v1186 = vsub.s32 0, %v1183
    %v1187 = vsel %vm1185, %v1186, %v1183
    %v1188 = vshrl.u32 %v1187, 3
    %v1189 = vand.u32 %v1187, 7
    %v1190 = vsub.s32 0, %v1189
    %v1191 = vsel %vm1185, %v1190, %v1189
    %vm1192 = vcmp.lt.s32.totalorder %v1184, 0
    %v1193 = vsub.s32 0, %v1184
    %v1194 = vsel %vm1192, %v1193, %v1184
    %v1195 = vshrl.u32 %v1194, 3
    %v1196 = vand.u32 %v1194, 7
    %v1197 = vsub.s32 0, %v1196
    %v1198 = vsel %vm1192, %v1197, %v1196
    %vm1199 = vcmp.ne.s32.totalorder %v1191, 0
    %vm1200 = vcmp.ne.s32.totalorder %v1198, 0
    %vm1201 = vcmp.lt.s32.totalorder %v1191, 0
    %vm1202 = vcmp.lt.s32.totalorder %v1198, 0
    %vm1203 = vmand %vm1201, %vm1199
    %vm1204 = vmand %vm1202, %vm1200
    %v1205 = vadd.s32 %v1191, 8
    %v1206 = vadd.s32 %v1198, 8
    %v1207 = vsel %vm1203, %v1205, %v1191
    %v1208 = vsel %vm1204, %v1206, %v1198
    %v1209 = vrot.slane %v1180, 4
    %v1210 = vrot.slane %v1181, 4
    %vm1211 = vcmp.lt.s32.totalorder %v1183, 4
    %v1212 = vsel %vm1211, %v1209, %v1210
    %v1213 = vsel %vm1211, %v1210, %v1209
    %v1214 = vadd.s32 %v1207, 4294967292
    %v1215 = vadd.s32 %v1208, 4294967292
    %vm1216 = vcmp.ge.s32.totalorder %v1214, 0
    %vm1217 = vcmp.ge.s32.totalorder %v1215, 0
    %vm1218 = vcmp.lt.s32.totalorder %v1214, 8
    %vm1219 = vcmp.lt.s32.totalorder %v1215, 8
    %vm1220 = vmand %vm1216, %vm1218
    %vm1221 = vmand %vm1217, %vm1219
    %v1222 = vsel %vm1220, 1, 0
    %v1223 = vsel %vm1221, 1, 0
    %vm1224 = vcmp.eq.s32.totalorder %v1222, 1
    %vm1225 = vcmp.eq.s32.totalorder %v1223, 1
    %v1226 = vsel %vm1224, %v1213, 0.0
    %v1227 = vsel %vm1225, %v1212, 0.0
    %v1228 = vrot.slane %v1180, 5
    %v1229 = vrot.slane %v1181, 5
    %vm1230 = vcmp.lt.s32.totalorder %v1183, 3
    %v1231 = vsel %vm1230, %v1228, %v1229
    %v1232 = vsel %vm1230, %v1229, %v1228
    %v1233 = vadd.s32 %v1207, 4294967293
    %v1234 = vadd.s32 %v1208, 4294967293
    %vm1235 = vcmp.ge.s32.totalorder %v1233, 0
    %vm1236 = vcmp.ge.s32.totalorder %v1234, 0
    %vm1237 = vcmp.lt.s32.totalorder %v1233, 8
    %vm1238 = vcmp.lt.s32.totalorder %v1234, 8
    %vm1239 = vmand %vm1235, %vm1237
    %vm1240 = vmand %vm1236, %vm1238
    %v1241 = vsel %vm1239, 1, 0
    %v1242 = vsel %vm1240, 1, 0
    %vm1243 = vcmp.eq.s32.totalorder %v1241, 1
    %vm1244 = vcmp.eq.s32.totalorder %v1242, 1
    %v1245 = vsel %vm1243, %v1232, 0.0
    %v1246 = vsel %vm1244, %v1231, 0.0
    %v1247 = vrot.slane %v1180, 6
    %v1248 = vrot.slane %v1181, 6
    %vm1249 = vcmp.lt.s32.totalorder %v1183, 2
    %v1250 = vsel %vm1249, %v1247, %v1248
    %v1251 = vsel %vm1249, %v1248, %v1247
    %v1252 = vadd.s32 %v1207, 4294967294
    %v1253 = vadd.s32 %v1208, 4294967294
    %vm1254 = vcmp.ge.s32.totalorder %v1252, 0
    %vm1255 = vcmp.ge.s32.totalorder %v1253, 0
    %vm1256 = vcmp.lt.s32.totalorder %v1252, 8
    %vm1257 = vcmp.lt.s32.totalorder %v1253, 8
    %vm1258 = vmand %vm1254, %vm1256
    %vm1259 = vmand %vm1255, %vm1257
    %v1260 = vsel %vm1258, 1, 0
    %v1261 = vsel %vm1259, 1, 0
    %vm1262 = vcmp.eq.s32.totalorder %v1260, 1
    %vm1263 = vcmp.eq.s32.totalorder %v1261, 1
    %v1264 = vsel %vm1262, %v1251, 0.0
    %v1265 = vsel %vm1263, %v1250, 0.0
    %v1266 = vrot.slane %v1180, 7
    %v1267 = vrot.slane %v1181, 7
    %vm1268 = vcmp.lt.s32.totalorder %v1183, 1
    %v1269 = vsel %vm1268, %v1266, %v1267
    %v1270 = vsel %vm1268, %v1267, %v1266
    %v1271 = vadd.s32 %v1207, 4294967295
    %v1272 = vadd.s32 %v1208, 4294967295
    %vm1273 = vcmp.ge.s32.totalorder %v1271, 0
    %vm1274 = vcmp.ge.s32.totalorder %v1272, 0
    %vm1275 = vcmp.lt.s32.totalorder %v1271, 8
    %vm1276 = vcmp.lt.s32.totalorder %v1272, 8
    %vm1277 = vmand %vm1273, %vm1275
    %vm1278 = vmand %vm1274, %vm1276
    %v1279 = vsel %vm1277, 1, 0
    %v1280 = vsel %vm1278, 1, 0
    %vm1281 = vcmp.eq.s32.totalorder %v1279, 1
    %vm1282 = vcmp.eq.s32.totalorder %v1280, 1
    %v1283 = vsel %vm1281, %v1270, 0.0
    %v1284 = vsel %vm1282, %v1269, 0.0
    %v1285 = vrot.slane %v1180, 1
    %v1286 = vrot.slane %v1181, 1
    %vm1287 = vcmp.lt.s32.totalorder %v1183, 7
    %v1288 = vsel %vm1287, %v1285, %v1286
    %v1289 = vsel %vm1287, %v1286, %v1285
    %v1290 = vadd.s32 %v1207, 1
    %v1291 = vadd.s32 %v1208, 1
    %vm1292 = vcmp.ge.s32.totalorder %v1290, 0
    %vm1293 = vcmp.ge.s32.totalorder %v1291, 0
    %vm1294 = vcmp.lt.s32.totalorder %v1290, 8
    %vm1295 = vcmp.lt.s32.totalorder %v1291, 8
    %vm1296 = vmand %vm1292, %vm1294
    %vm1297 = vmand %vm1293, %vm1295
    %v1298 = vsel %vm1296, 1, 0
    %v1299 = vsel %vm1297, 1, 0
    %vm1300 = vcmp.eq.s32.totalorder %v1298, 1
    %vm1301 = vcmp.eq.s32.totalorder %v1299, 1
    %v1302 = vsel %vm1300, %v1288, 0.0
    %v1303 = vsel %vm1301, %v1289, 0.0
    %v1304 = vrot.slane %v1180, 2
    %v1305 = vrot.slane %v1181, 2
    %vm1306 = vcmp.lt.s32.totalorder %v1183, 6
    %v1307 = vsel %vm1306, %v1304, %v1305
    %v1308 = vsel %vm1306, %v1305, %v1304
    %v1309 = vadd.s32 %v1207, 2
    %v1310 = vadd.s32 %v1208, 2
    %vm1311 = vcmp.ge.s32.totalorder %v1309, 0
    %vm1312 = vcmp.ge.s32.totalorder %v1310, 0
    %vm1313 = vcmp.lt.s32.totalorder %v1309, 8
    %vm1314 = vcmp.lt.s32.totalorder %v1310, 8
    %vm1315 = vmand %vm1311, %vm1313
    %vm1316 = vmand %vm1312, %vm1314
    %v1317 = vsel %vm1315, 1, 0
    %v1318 = vsel %vm1316, 1, 0
    %vm1319 = vcmp.eq.s32.totalorder %v1317, 1
    %vm1320 = vcmp.eq.s32.totalorder %v1318, 1
    %v1321 = vsel %vm1319, %v1307, 0.0
    %v1322 = vsel %vm1320, %v1308, 0.0
    %v1323 = vrot.slane %v1180, 3
    %v1324 = vrot.slane %v1181, 3
    %vm1325 = vcmp.lt.s32.totalorder %v1183, 5
    %v1326 = vsel %vm1325, %v1323, %v1324
    %v1327 = vsel %vm1325, %v1324, %v1323
    %v1328 = vadd.s32 %v1207, 3
    %v1329 = vadd.s32 %v1208, 3
    %vm1330 = vcmp.ge.s32.totalorder %v1328, 0
    %vm1331 = vcmp.ge.s32.totalorder %v1329, 0
    %vm1332 = vcmp.lt.s32.totalorder %v1328, 8
    %vm1333 = vcmp.lt.s32.totalorder %v1329, 8
    %vm1334 = vmand %vm1330, %vm1332
    %vm1335 = vmand %vm1331, %vm1333
    %v1336 = vsel %vm1334, 1, 0
    %v1337 = vsel %vm1335, 1, 0
    %vm1338 = vcmp.eq.s32.totalorder %v1336, 1
    %vm1339 = vcmp.eq.s32.totalorder %v1337, 1
    %v1340 = vsel %vm1338, %v1326, 0.0
    %v1341 = vsel %vm1339, %v1327, 0.0
    %v1342 = vadd.s32 %v1207, 4
    %v1343 = vadd.s32 %v1208, 4
    %vm1344 = vcmp.ge.s32.totalorder %v1342, 0
    %vm1345 = vcmp.ge.s32.totalorder %v1343, 0
    %vm1346 = vcmp.lt.s32.totalorder %v1342, 8
    %vm1347 = vcmp.lt.s32.totalorder %v1343, 8
    %vm1348 = vmand %vm1344, %vm1346
    %vm1349 = vmand %vm1345, %vm1347
    %v1350 = vsel %vm1348, 1, 0
    %v1351 = vsel %vm1349, 1, 0
    %vm1352 = vcmp.eq.s32.totalorder %v1350, 1
    %vm1353 = vcmp.eq.s32.totalorder %v1351, 1
    %v1354 = vsel %vm1352, %v1212, 0.0
    %v1355 = vsel %vm1353, %v1213, 0.0
    %1358 = vrot.lane.b32.xlu0 %v1245, 32
    %v1359 = vpop.permute.xlu0 %1358
    %1360 = vrot.lane.b32.xlu0 %v1246, 32
    %v1361 = vpop.permute.xlu0 %1360
    %1366 = vrot.lane.b32.xlu0 %v1264, 64
    %v1367 = vpop.permute.xlu0 %1366
    %1368 = vrot.lane.b32.xlu0 %v1265, 64
    %v1369 = vpop.permute.xlu0 %1368
    %1374 = vrot.lane.b32.xlu0 %v1283, 96
    %v1375 = vpop.permute.xlu0 %1374
    %1376 = vrot.lane.b32.xlu0 %v1284, 96
    %v1377 = vpop.permute.xlu0 %1376
    %1382 = vrot.lane.b32.xlu0 %v1302, 32
    %v1383 = vpop.permute.xlu0 %1382
    %1384 = vrot.lane.b32.xlu0 %v1303, 32
    %v1385 = vpop.permute.xlu0 %1384
    %1390 = vrot.lane.b32.xlu0 %v1321, 64
    %v1391 = vpop.permute.xlu0 %1390
    %1392 = vrot.lane.b32.xlu0 %v1322, 64
    %v1393 = vpop.permute.xlu0 %1392
    %1398 = vrot.lane.b32.xlu0 %v1340, 96
    %v1399 = vpop.permute.xlu0 %1398
    %1400 = vrot.lane.b32.xlu0 %v1341, 96
    %v1401 = vpop.permute.xlu0 %1400
    %v1404 = vsel %vm81, %v1226, %v1359
    %v1405 = vsel %vm81, %v1227, %v1361
    %vm1406 = vcmask 523264
    %v1407 = vsel %vm1406, %v1404, %v1367
    %v1408 = vsel %vm1406, %v1405, %v1369
    %vm1409 = vcmask 785408
    %v1410 = vsel %vm1409, %v1407, %v1375
    %v1411 = vsel %vm1409, %v1408, %v1377
    %v1412 = vsel %vm81, %v1180, %v1383
    %v1413 = vsel %vm81, %v1181, %v1385
    %v1414 = vsel %vm1406, %v1412, %v1391
    %v1415 = vsel %vm1406, %v1413, %v1393
    %v1416 = vsel %vm1409, %v1414, %v1399
    %v1417 = vsel %vm1409, %v1415, %v1401
    %v1418 = vpack.c.bf16 %v1411, %v1410
    %v1419 = vpack.c.bf16 %v1417, %v1416
    %v1420 = vpack.c.bf16 %v1355, %v1354
    %v1421 = vld [vmem:[%s17] sm:$0xf]
    %v1422 = vld [vmem:[%s17 + $0x4] sm:$0xf]
    %v1423 = vld [vmem:[%s17 + $0x8] sm:$0xf]
    %v1424 = vld [vmem:[%s17 + $0xc] sm:$0xf]
    %v1425 = vld [vmem:[%s17 + $0x10] sm:$0xf]
    %v1426 = vld [vmem:[%s17 + $0x14] sm:$0xf]
    %v1427 = vld [vmem:[%s17 + $0x18] sm:$0xf]
    %v1428 = vld [vmem:[%s17 + $0x1c] sm:$0xf]
    %v1429 = vld [vmem:[%s17 + $0x20] sm:$0xf]
    %v1430 = vld [vmem:[%s17 + $0x24] sm:$0xf]
    %v1431 = vld [vmem:[%s17 + $0x28] sm:$0xf]
    %v1432 = vld [vmem:[%s17 + $0x2c] sm:$0xf]
    %v1433 = vld [vmem:[%s17 + $0x30] sm:$0xf]
    %v1434 = vld [vmem:[%s17 + $0x34] sm:$0xf]
    %v1435 = vld [vmem:[%s17 + $0x38] sm:$0xf]
    %v1436 = vld [vmem:[%s17 + $0x3c] sm:$0xf]
    %v1437 = vld [vmem:[%s17 + $0x40] sm:$0xf]
    %v1438 = vld [vmem:[%s17 + $0x44] sm:$0xf]
    %v1439 = vld [vmem:[%s17 + $0x48] sm:$0xf]
    %v1440 = vld [vmem:[%s17 + $0x4c] sm:$0xf]
    %v1441 = vld [vmem:[%s17 + $0x50] sm:$0xf]
    %v1442 = vld [vmem:[%s17 + $0x54] sm:$0xf]
    %v1443 = vld [vmem:[%s17 + $0x58] sm:$0xf]
    %v1444 = vld [vmem:[%s17 + $0x5c] sm:$0xf]
    %v1445 = vld [vmem:[%s17 + $0x60] sm:$0xf]
    %v1446 = vld [vmem:[%s17 + $0x64] sm:$0xf]
    %v1447 = vld [vmem:[%s17 + $0x68] sm:$0xf]
    %v1448 = vld [vmem:[%s17 + $0x6c] sm:$0xf]
    %v1449 = vld [vmem:[%s17 + $0x70] sm:$0xf]
    %v1450 = vld [vmem:[%s17 + $0x74] sm:$0xf]
    %v1451 = vld [vmem:[%s17 + $0x78] sm:$0xf]
    %v1452 = vld [vmem:[%s17 + $0x7c] sm:$0xf]
    %v1453 = vld [vmem:[%s17 + $0x80] sm:$0xf]
    %v1454 = vld [vmem:[%s17 + $0x84] sm:$0xf]
    %v1455 = vld [vmem:[%s17 + $0x88] sm:$0xf]
    %v1456 = vld [vmem:[%s17 + $0x8c] sm:$0xf]
    %v1457 = vld [vmem:[%s18] sm:$0x1]
    %v1459 = vlaneseq
    %v1460 = vshrl.u32 %v1459, 7
    %v1461 = vsub.s32 0, %v1460
    %v1462 = vrot.slane %v1457, %v1461
    %v1500 = vunpack.c.l.b16 %v1421
    %v1501 = vunpack.c.l.b16 %v1422
    %v1502 = vunpack.c.l.b16 %v1423
    %v1503 = vunpack.c.l.b16 %v1424
    %v1504 = vunpack.c.l.b16 %v1425
    %v1505 = vunpack.c.l.b16 %v1426
    %v1506 = vunpack.c.l.b16 %v1427
    %v1507 = vunpack.c.l.b16 %v1428
    %v1508 = vunpack.c.l.b16 %v1429
    %v1509 = vunpack.c.l.b16 %v1430
    %v1510 = vunpack.c.l.b16 %v1431
    %v1511 = vunpack.c.l.b16 %v1432
    %v1512 = vunpack.c.l.b16 %v1433
    %v1513 = vunpack.c.l.b16 %v1434
    %v1514 = vunpack.c.l.b16 %v1435
    %v1515 = vunpack.c.l.b16 %v1436
    %v1516 = vunpack.c.l.b16 %v1437
    %v1517 = vunpack.c.l.b16 %v1438
    %v1518 = vunpack.c.l.b16 %v1439
    %v1519 = vunpack.c.l.b16 %v1440
    %v1520 = vunpack.c.l.b16 %v1441
    %v1521 = vunpack.c.l.b16 %v1442
    %v1522 = vunpack.c.l.b16 %v1443
    %v1523 = vunpack.c.l.b16 %v1444
    %v1524 = vunpack.c.l.b16 %v1445
    %v1525 = vunpack.c.l.b16 %v1446
    %v1526 = vunpack.c.l.b16 %v1447
    %v1527 = vunpack.c.l.b16 %v1448
    %v1528 = vunpack.c.l.b16 %v1449
    %v1529 = vunpack.c.l.b16 %v1450
    %v1530 = vunpack.c.l.b16 %v1451
    %v1531 = vunpack.c.l.b16 %v1452
    %v1532 = vunpack.c.l.b16 %v1453
    %v1533 = vunpack.c.l.b16 %v1454
    %v1534 = vunpack.c.l.b16 %v1455
    %v1535 = vunpack.c.l.b16 %v1456
    %v1536 = vpack.c.b16 %v1501, %v1500
    %v1537 = vpack.c.b16 %v1503, %v1502
    %v1538 = vpack.c.b16 %v1505, %v1504
    %v1539 = vpack.c.b16 %v1507, %v1506
    %v1540 = vpack.c.b16 %v1509, %v1508
    %v1541 = vpack.c.b16 %v1511, %v1510
    %v1542 = vpack.c.b16 %v1513, %v1512
    %v1543 = vpack.c.b16 %v1515, %v1514
    %v1544 = vpack.c.b16 %v1517, %v1516
    %v1545 = vpack.c.b16 %v1519, %v1518
    %v1546 = vpack.c.b16 %v1521, %v1520
    %v1547 = vpack.c.b16 %v1523, %v1522
    %v1548 = vpack.c.b16 %v1525, %v1524
    %v1549 = vpack.c.b16 %v1527, %v1526
    %v1550 = vpack.c.b16 %v1529, %v1528
    %v1551 = vpack.c.b16 %v1531, %v1530
    %v1552 = vpack.c.b16 %v1533, %v1532
    %v1553 = vpack.c.b16 %v1535, %v1534
    %v1573 = vsel %vm81, %v1420, 0
    %1575 = vmatprep.subr.bf16.mxu0 0
    %1576 = vmatpush1.bf16.msra.mxu0 %v1536
    %1577 = vmatprep.subr.bf16.mxu0 0
    %1578 = vmatpush1.bf16.msra.mxu0 %v1537
    %1579 = vmatprep.subr.bf16.mxu0 0
    %1580 = vmatpush1.bf16.msra.mxu0 %v1538
    %1581 = vmatprep.subr.bf16.mxu0 0
    %1582 = vmatpush1.bf16.msra.mxu0 %v1539
    %1583 = vmatprep.subr.bf16.mxu0 0
    %1584 = vmatpush1.bf16.msra.mxu0 %v1540
    %1585 = vmatprep.subr.bf16.mxu0 0
    %1586 = vmatpush1.bf16.msra.mxu0 %v1541
    %1587 = vmatprep.subr.bf16.mxu0 0
    %1588 = vmatpush1.bf16.msra.mxu0 %v1542
    %1589 = vmatprep.subr.bf16.mxu0 0
    %1590 = vmatpush1.bf16.msra.mxu0 %v1543
    %1591 = vmatprep.subr.bf16.mxu0 0
    %1592 = vmatpush1.bf16.msra.mxu0 %v1544
    %1593 = vmatprep.subr.bf16.mxu0 0
    %1594 = vmatpush1.bf16.msra.mxu0 %v1545
    %1595 = vmatprep.subr.bf16.mxu0 0
    %1596 = vmatpush1.bf16.msra.mxu0 %v1546
    %1597 = vmatprep.subr.bf16.mxu0 0
    %1598 = vmatpush1.bf16.msra.mxu0 %v1547
    %1599 = vmatprep.subr.bf16.mxu0 0
    %1600 = vmatpush1.bf16.msra.mxu0 %v1548
    %1601 = vmatprep.subr.bf16.mxu0 0
    %1602 = vmatpush1.bf16.msra.mxu0 %v1549
    %1603 = vmatprep.subr.bf16.mxu0 0
    %1604 = vmatpush1.bf16.msra.mxu0 %v1550
    %1605 = vmatprep.subr.bf16.mxu0 0
    %1606 = vmatpush1.bf16.msra.mxu0 %v1551
    %1607 = vmatprep.mubr.bf16.mxu0 %v1419
    %1608 = vmatmul.mubr.bf16.gmra.mrb[0].mxu0 %v1418
    %v1609 = vpop.f32.mrb[0].mxu0
    %v1610 = vadd.f32 %v1462, %v1609
    %v1611 = vpop.f32.mrb[0].mxu0
    %v1612 = vpop.f32.mrb[0].mxu0
    %v1613 = vadd.f32 %v1462, %v1612
    %v1614 = vpop.f32.mrb[0].mxu0
    %1615 = vdwg.mxu0
    %1616 = vmatprep.subr.bf16.mxu0 0
    %1617 = vmatpush1.bf16.msra.mxu0 %v1552
    %1618 = vmatprep.subr.bf16.mxu0 0
    %1619 = vmatpush1.bf16.msra.mxu0 %v1553
    %1620 = vmatprep.subr.bf16.mxu0 0
    %1621 = vmatpush1.bf16.msra.mxu0 0
    %1622 = vmatprep.subr.bf16.mxu0 0
    %1623 = vmatpush1.bf16.msra.mxu0 0
    %1624 = vmatprep.subr.bf16.mxu0 0
    %1625 = vmatpush1.bf16.msra.mxu0 0
    %1626 = vmatprep.subr.bf16.mxu0 0
    %1627 = vmatpush1.bf16.msra.mxu0 0
    %1628 = vmatprep.subr.bf16.mxu0 0
    %1629 = vmatpush1.bf16.msra.mxu0 0
    %1630 = vmatprep.subr.bf16.mxu0 0
    %1631 = vmatpush1.bf16.msra.mxu0 0
    %1632 = vmatprep.subr.bf16.mxu0 0
    %1633 = vmatpush1.bf16.msra.mxu0 0
    %1634 = vmatprep.subr.bf16.mxu0 0
    %1635 = vmatpush1.bf16.msra.mxu0 0
    %1636 = vmatprep.subr.bf16.mxu0 0
    %1637 = vmatpush1.bf16.msra.mxu0 0
    %1638 = vmatprep.subr.bf16.mxu0 0
    %1639 = vmatpush1.bf16.msra.mxu0 0
    %1640 = vmatprep.subr.bf16.mxu0 0
    %1641 = vmatpush1.bf16.msra.mxu0 0
    %1642 = vmatprep.subr.bf16.mxu0 0
    %1643 = vmatpush1.bf16.msra.mxu0 0
    %1644 = vmatprep.subr.bf16.mxu0 0
    %1645 = vmatpush1.bf16.msra.mxu0 0
    %1646 = vmatprep.subr.bf16.mxu0 0
    %1647 = vmatpush1.bf16.msra.mxu0 0
    %1648 = vmatprep.mubr.bf16.mxu0 0
    %1649 = vmatmul.mubr.bf16.gmra.mrb[0].mxu0 %v1573
    %v1650 = vpop.f32.mrb[0].mxu0
    %v1651 = vadd.f32 %v1610, %v1650
    %v1652 = vpop.f32.mrb[0].mxu0
    %v1653 = vpop.f32.mrb[0].mxu0
    %v1654 = vadd.f32 %v1613, %v1653
    %v1655 = vpop.f32.mrb[0].mxu0
    %1656 = vdwg.mxu0
    %v1657 = vmax.f32 %v1651, 0.0
    %v1658 = vmax.f32 %v1654, 0.0
    %v1659 = vpack.c.bf16 %v1658, %v1657
    %v1660 = vld [vmem:[%s19] sm:$0xf]
    %v1661 = vld [vmem:[%s19 + $0x4] sm:$0xf]
    %v1662 = vld [vmem:[%s19 + $0x8] sm:$0xf]
    %v1663 = vld [vmem:[%s19 + $0xc] sm:$0xf]
    %v1664 = vld [vmem:[%s19 + $0x10] sm:$0xf]
    %v1665 = vld [vmem:[%s19 + $0x14] sm:$0xf]
    %v1666 = vld [vmem:[%s19 + $0x18] sm:$0xf]
    %v1667 = vld [vmem:[%s19 + $0x1c] sm:$0xf]
    %v1668 = vld [vmem:[%s20] sm:$0x1]
    %v1670 = vlaneseq
    %v1671 = vshrl.u32 %v1670, 7
    %v1672 = vsub.s32 0, %v1671
    %v1673 = vrot.slane %v1668, %v1672
    %v1683 = vunpack.c.l.b16 %v1660
    %v1684 = vunpack.c.l.b16 %v1661
    %v1685 = vunpack.c.l.b16 %v1662
    %v1686 = vunpack.c.l.b16 %v1663
    %v1687 = vunpack.c.l.b16 %v1664
    %v1688 = vunpack.c.l.b16 %v1665
    %v1689 = vunpack.c.l.b16 %v1666
    %v1690 = vunpack.c.l.b16 %v1667
    %v1691 = vpack.c.b16 %v1684, %v1683
    %v1692 = vpack.c.b16 %v1686, %v1685
    %v1693 = vpack.c.b16 %v1688, %v1687
    %v1694 = vpack.c.b16 %v1690, %v1689
    %v1700 = vsel %vm1406, %v1659, 0
    %1702 = vmatprep.subr.bf16.mxu0 0
    %1703 = vmatpush1.bf16.msra.mxu0 %v1691
    %1704 = vmatprep.subr.bf16.mxu0 0
    %1705 = vmatpush1.bf16.msra.mxu0 %v1692
    %1706 = vmatprep.subr.bf16.mxu0 0
    %1707 = vmatpush1.bf16.msra.mxu0 %v1693
    %1708 = vmatprep.subr.bf16.mxu0 0
    %1709 = vmatpush1.bf16.msra.mxu0 %v1694
    %1710 = vmatprep.subr.bf16.mxu0 0
    %1711 = vmatpush1.bf16.msra.mxu0 0
    %1712 = vmatprep.subr.bf16.mxu0 0
    %1713 = vmatpush1.bf16.msra.mxu0 0
    %1714 = vmatprep.subr.bf16.mxu0 0
    %1715 = vmatpush1.bf16.msra.mxu0 0
    %1716 = vmatprep.subr.bf16.mxu0 0
    %1717 = vmatpush1.bf16.msra.mxu0 0
    %1718 = vmatprep.subr.bf16.mxu0 0
    %1719 = vmatpush1.bf16.msra.mxu0 0
    %1720 = vmatprep.subr.bf16.mxu0 0
    %1721 = vmatpush1.bf16.msra.mxu0 0
    %1722 = vmatprep.subr.bf16.mxu0 0
    %1723 = vmatpush1.bf16.msra.mxu0 0
    %1724 = vmatprep.subr.bf16.mxu0 0
    %1725 = vmatpush1.bf16.msra.mxu0 0
    %1726 = vmatprep.subr.bf16.mxu0 0
    %1727 = vmatpush1.bf16.msra.mxu0 0
    %1728 = vmatprep.subr.bf16.mxu0 0
    %1729 = vmatpush1.bf16.msra.mxu0 0
    %1730 = vmatprep.subr.bf16.mxu0 0
    %1731 = vmatpush1.bf16.msra.mxu0 0
    %1732 = vmatprep.subr.bf16.mxu0 0
    %1733 = vmatpush1.bf16.msra.mxu0 0
    %1734 = vmatprep.mubr.bf16.mxu0 0
    %1735 = vmatmul.mubr.bf16.gmra.mrb[0].mxu0 %v1700
    %v1736 = vpop.f32.mrb[0].mxu0
    %v1737 = vadd.f32 %v1673, %v1736
    %v1738 = vpop.f32.mrb[0].mxu0
    %v1739 = vpop.f32.mrb[0].mxu0
    %v1740 = vadd.f32 %v1673, %v1739
    %v1741 = vpop.f32.mrb[0].mxu0
    %1742 = vdwg.mxu0
    %v1743 = vadd.f32 %v1737, %v1180
    %v1744 = vadd.f32 %v1740, %v1181
    %v1745 = vmul.f32 %v1743, %v1173
    %v1746 = vmul.f32 %v1744, %v1178
    %1747 = vst.msk [vmem:[#allocation2] sm:$0xff] %vm81, %v1745
    %1748 = vst.msk [vmem:[#allocation2 + $0x8] sm:$0xff] %vm81, %v1746
    // Predicated region
    $region86: #{tpu_custom_call.1} parent=1 // pred_check
      _
    $region87: #{tpu_custom_call.1} parent=1 // pred_check_branch
      %1750 = sbr.rel (0) target = $region89
    $region88: #{tpu_custom_call.1} parent=1 // pred_region
      %s1752 = ssub.s32 256, 256
      %1753 = vsyncadd [#allocation3], %s1752
      %s1754 = sshll.u32 [#allocation2], 4
      %s1755 = int_to_ptr.vmem [resolvable:$true] %s1754
      %1760 = dma.vmem_to_hbm [thread:$0]  %s1755, 256, %s21, [#allocation3], 128, 128, 8
    $region89: #{tpu_custom_call.1} parent=1 // pred_fallthru
      _
    // Predicated region
    $region90: #{tpu_custom_call.1} parent=1 // pred_check
      _
    $region91: #{tpu_custom_call.1} parent=1 // pred_check_branch
      %1762 = sbr.rel (0) target = $region93
    $region92: #{tpu_custom_call.1} parent=1 // pred_region
      %s1764 = ssub.s32 512, 512
      %1765 = vsyncadd [#allocation5], %s1764
      %s1766 = sshll.u32 [#allocation4], 4
      %s1767 = int_to_ptr.vmem [resolvable:$true] %s1766
      %1772 = dma.vmem_to_hbm [thread:$0]  %s1767, 512, %s22, [#allocation5], 128, 128, 8
    $region93: #{tpu_custom_call.1} parent=1 // pred_fallthru
      _
    // Predicated region
    $region94: #{tpu_custom_call.1} parent=1 // pred_check
      _
    $region95: #{tpu_custom_call.1} parent=1 // pred_check_branch
      %1774 = sbr.rel (0) target = $region97
    $region96: #{tpu_custom_call.1} parent=1 // pred_region
      %1775 = dma.done [#allocation3], 256
    $region97: #{tpu_custom_call.1} parent=1 // pred_fallthru
      _
    // Predicated region
    $region98: #{tpu_custom_call.1} parent=1 // pred_check
      _
    $region99: #{tpu_custom_call.1} parent=1 // pred_check_branch
      %1777 = sbr.rel (0) target = $region101
    $region100: #{tpu_custom_call.1} parent=1 // pred_region
      %1778 = dma.done [#allocation5], 512
    $region101: #{tpu_custom_call.1} parent=1 // pred_fallthru
      _
    %1779 = vsyncpa [#allocation3], 1
    %1780 = vsyncpa [#allocation5], 1

</llo_original>
